<compile_context>
chip_gen: v7x
topology: tpu7x:2x2x1
jax: 0.10.0
libtpu: 0.0.40
codegen_flags: <defaults>
</compile_context>

<pallas_src>
import math

import jax
import jax.numpy as jnp
from jax.experimental import pallas as pl
from jax.experimental.pallas import tpu as pltpu

# ---------------- config ----------------
B = 2
C = 3
IMG = 16
PS = 8
NP = (IMG // PS) ** 2          # 4 patches
SEQ = NP + 1                   # 5 (CLS + patches)
ROWS = B * SEQ                 # 10: batch folded into the row/sublane axis
HID = 32
HEADS = 2
HD = HID // HEADS              # 16
MLP = 64
LAYERS = 2
NCLS = 10
NCLS_PAD = 128                 # lane-dense (zero-padded) classifier width
PATCH_DIM = C * PS * PS        # 192
LN_EPS = 1e-12                 # HF ViT default
NEG_INF = -1e30                # cross-batch attention bias


# ---------------- in-kernel helpers ----------------
def _layer_norm(x, gamma, beta, eps=LN_EPS):
    mu = jnp.mean(x, axis=-1, keepdims=True)
    xc = x - mu
    var = jnp.mean(xc * xc, axis=-1, keepdims=True)
    inv = jax.lax.rsqrt(var + eps)
    return xc * inv * gamma + beta


def _gelu_tanh(x):
    # tanh-approx GELU (EUP-friendly).
    # TODO(synk): HF ViT default is exact erf GELU; erf has no guaranteed Mosaic lowering here.
    c = math.sqrt(2.0 / math.pi)
    return 0.5 * x * (1.0 + jnp.tanh(c * (x + 0.044715 * x * x * x)))


# ---------------- fused kernel ----------------
def fused_vit_kernel(xp_ref, pe_w_ref, pos_ref, bias_ref,
                     ln1g_ref, ln1b_ref, wqkv_ref, bqkv_ref, wo_ref, bo_ref,
                     ln2g_ref, ln2b_ref, w1_ref, b1_ref, w2_ref, b2_ref,
                     lnf_g_ref, lnf_b_ref, clsw_ref, clsb_ref,
                     o_ref):
    scale = 1.0 / math.sqrt(HD)
    attn_bias = bias_ref[...]                 # (ROWS, ROWS): 0 within batch, -1e30 across

    # ---- patch embedding, batch stacked along rows ----
    # xp rows b*SEQ are all-zero -> become CLS via pos_adj (CLS/pos/bias folded host-side).
    x = (jnp.dot(xp_ref[...], pe_w_ref[...], preferred_element_type=jnp.float32)
         + pos_ref[...])                      # (ROWS, HID)

    # ---- encoder layers (static unroll) ----
    for l in range(LAYERS):
        # self-attention block (pre-LN, ViT style)
        xn = _layer_norm(x, ln1g_ref[l], ln1b_ref[l])
        qkv = (jnp.dot(xn, wqkv_ref[l], preferred_element_type=jnp.float32)
               + bqkv_ref[l])                                   # (ROWS, 3*HID)
        wo = wo_ref[l]                                          # (HID, HID)
        attn = bo_ref[l]                                        # (1, HID), broadcasts
        for h in range(HEADS):                                  # static head loop
            qh = qkv[:, h * HD:(h + 1) * HD]
            kh = qkv[:, HID + h * HD:HID + (h + 1) * HD]
            vh = qkv[:, 2 * HID + h * HD:2 * HID + (h + 1) * HD]
            # block-diagonal (cross-batch masked) attention, whole batch in one matmul
            s = (jnp.dot(qh, kh.T, preferred_element_type=jnp.float32) * scale
                 + attn_bias)
            s = s - jnp.max(s, axis=-1, keepdims=True)
            p = jnp.exp(s)
            p = p * pl.reciprocal(jnp.sum(p, axis=-1, keepdims=True), approx=True)
            ctx_h = jnp.dot(p, vh, preferred_element_type=jnp.float32)   # (ROWS, HD)
            # fold output projection per head -> no lane-axis concatenate
            attn = attn + jnp.dot(ctx_h, wo[h * HD:(h + 1) * HD, :],
                                  preferred_element_type=jnp.float32)
        x = x + attn

        # MLP block
        xn2 = _layer_norm(x, ln2g_ref[l], ln2b_ref[l])
        h1 = jnp.dot(xn2, w1_ref[l], preferred_element_type=jnp.float32) + b1_ref[l]
        h1 = _gelu_tanh(h1)
        x = x + jnp.dot(h1, w2_ref[l], preferred_element_type=jnp.float32) + b2_ref[l]

    # ---- head: final LN + classifier (padded to 128 lanes), then pick CLS rows ----
    xf = _layer_norm(x, lnf_g_ref[...], lnf_b_ref[...])                  # (ROWS, HID)
    logits = (jnp.dot(xf, clsw_ref[...], preferred_element_type=jnp.float32)
              + clsb_ref[...])                                           # (ROWS, NCLS_PAD)
    for b in range(B):                                                   # static, lane-dense rows
        o_ref[b:b + 1, :] = logits[b * SEQ:b * SEQ + 1, :]


# ---------------- pallas_call wrapper ----------------
def _const_spec(shape):
    n = len(shape)
    return pl.BlockSpec(shape, lambda i: (0,) * n)


def build_vit_forward():
    in_specs = [
        _const_spec((ROWS, PATCH_DIM)),                            # patches (zero CLS rows)
        _const_spec((PATCH_DIM, HID)),                             # pe_w
        _const_spec((ROWS, HID)),                                  # pos_adj (tiled over batch)
        _const_spec((ROWS, ROWS)),                                 # block-diag attention bias
        _const_spec((LAYERS, 1, HID)), _const_spec((LAYERS, 1, HID)),          # ln1 g,b
        _const_spec((LAYERS, HID, 3 * HID)), _const_spec((LAYERS, 1, 3 * HID)),  # qkv w,b
        _const_spec((LAYERS, HID, HID)), _const_spec((LAYERS, 1, HID)),        # out-proj w,b
        _const_spec((LAYERS, 1, HID)), _const_spec((LAYERS, 1, HID)),          # ln2 g,b
        _const_spec((LAYERS, HID, MLP)), _const_spec((LAYERS, 1, MLP)),        # fc1 w,b
        _const_spec((LAYERS, MLP, HID)), _const_spec((LAYERS, 1, HID)),        # fc2 w,b
        _const_spec((1, HID)), _const_spec((1, HID)),              # final LN g,b
        _const_spec((HID, NCLS_PAD)), _const_spec((1, NCLS_PAD)),  # classifier w,b (padded)
    ]

    call = pl.pallas_call(
        fused_vit_kernel,
        out_shape=jax.ShapeDtypeStruct((B, NCLS_PAD), jnp.float32),
        grid=(1,),
        in_specs=in_specs,
        out_specs=pl.BlockSpec((B, NCLS_PAD), lambda i: (0, 0)),
        compiler_params=pltpu.CompilerParams(dimension_semantics=("arbitrary",)),
    )

    @jax.jit
    def fwd(x, params):
        # x: (B, C, IMG, IMG) NCHW, like PyTorch.
        # TODO(synk): im2col (stride==kernel conv) stays in XLA; the 6-D transpose of
        # the NCHW image has no clean/safe Mosaic lowering at this layout.
        hn = IMG // PS
        xp = x.reshape(B, C, hn, PS, hn, PS)
        xp = jnp.transpose(xp, (0, 2, 4, 1, 3, 5)).reshape(B, NP, PATCH_DIM)
        xp = jnp.pad(xp, ((0, 0), (1, 0), (0, 0)))      # zero CLS row per batch element
        xp = xp.reshape(ROWS, PATCH_DIM)                # batch folded into rows

        # block-diagonal additive attention bias (constant, folded by XLA)
        ids = jnp.arange(ROWS, dtype=jnp.int32) // SEQ
        attn_bias = jnp.where(ids[:, None] == ids[None, :], 0.0, NEG_INF).astype(jnp.float32)

        logits_pad = call(
            xp, params["pe_w"], params["pos_adj"], attn_bias,
            params["ln1_g"], params["ln1_b"], params["wqkv"], params["bqkv"],
            params["wo"], params["bo"], params["ln2_g"], params["ln2_b"],
            params["w1"], params["b1"], params["w2"], params["b2"],
            params["ln_f_g"], params["ln_f_b"], params["cls_w"], params["cls_b"],
        )
        return logits_pad[:, :NCLS]

    return fwd


# ---------------- parameter init (deterministic) ----------------
def init_params(key):
    def nrm(k, shape, std=0.02):
        return jax.random.normal(k, shape, jnp.float32) * std

    keys = jax.random.split(key, 8 + LAYERS)
    p = {}

    # patch-embedding conv (hidden, C, ps, ps) -> matmul weight (PATCH_DIM, HID)
    w_conv = nrm(keys[0], (HID, C, PS, PS))
    p["pe_w"] = w_conv.reshape(HID, PATCH_DIM).T
    pe_b = jnp.zeros((1, HID), jnp.float32)

    cls_tok = nrm(keys[1], (1, HID))
    pos = nrm(keys[2], (SEQ, HID))
    # Fold CLS token + patch-embed bias into the position table, then tile over batch:
    #   row 0 (CLS, zero patch row):  pos[0] + cls
    #   rows 1..: pos[i] + pe_b
    pos_adj = pos + jnp.concatenate([cls_tok, jnp.tile(pe_b, (NP, 1))], axis=0)
    p["pos_adj"] = jnp.tile(pos_adj, (B, 1))            # (ROWS, HID)

    p["ln_f_g"] = jnp.ones((1, HID), jnp.float32)
    p["ln_f_b"] = jnp.zeros((1, HID), jnp.float32)

    cls_w = nrm(keys[3], (HID, NCLS))
    p["cls_w"] = jnp.zeros((HID, NCLS_PAD), jnp.float32).at[:, :NCLS].set(cls_w)
    p["cls_b"] = jnp.zeros((1, NCLS_PAD), jnp.float32)

    ln1_g, ln1_b, wqkv, bqkv, wo, bo = [], [], [], [], [], []
    ln2_g, ln2_b, w1, b1, w2, b2 = [], [], [], [], [], []
    for l in range(LAYERS):
        lk = jax.random.split(keys[8 + l], 6)
        ln1_g.append(jnp.ones((1, HID), jnp.float32))
        ln1_b.append(jnp.zeros((1, HID), jnp.float32))
        wq, wk, wv = nrm(lk[0], (HID, HID)), nrm(lk[1], (HID, HID)), nrm(lk[2], (HID, HID))
        wqkv.append(jnp.concatenate([wq, wk, wv], axis=1))          # (HID, 3*HID)
        bqkv.append(jnp.zeros((1, 3 * HID), jnp.float32))
        wo.append(nrm(lk[3], (HID, HID)))
        bo.append(jnp.zeros((1, HID), jnp.float32))
        ln2_g.append(jnp.ones((1, HID), jnp.float32))
        ln2_b.append(jnp.zeros((1, HID), jnp.float32))
        w1.append(nrm(lk[4], (HID, MLP)))
        b1.append(jnp.zeros((1, MLP), jnp.float32))
        w2.append(nrm(lk[5], (MLP, HID)))
        b2.append(jnp.zeros((1, HID), jnp.float32))

    stack = lambda xs: jnp.stack(xs, axis=0)
    p.update(ln1_g=stack(ln1_g), ln1_b=stack(ln1_b),
             wqkv=stack(wqkv), bqkv=stack(bqkv),
             wo=stack(wo), bo=stack(bo),
             ln2_g=stack(ln2_g), ln2_b=stack(ln2_b),
             w1=stack(w1), b1=stack(b1), w2=stack(w2), b2=stack(b2))
    return p


if __name__ == "__main__":
    key = jax.random.PRNGKey(0)
    kx, kp = jax.random.split(key)
    x = jax.random.normal(kx, (B, C, IMG, IMG), jnp.float32)
    params = init_params(kp)

    vit_forward = build_vit_forward()
    logits = jax.block_until_ready(vit_forward(x, params))
    assert logits.shape == (B, NCLS)
    assert bool(jnp.all(jnp.isfinite(logits)))
    print("KERNEL_OK")
</pallas_src>

<mosaic_0001>
module attributes {stable_mosaic.version = 11 : i64} {
  func.func @fused_vit_kernel(%arg0: i32, %arg1: memref<10x192xf32, #tpu.memory_space<vmem>>, %arg2: memref<192x32xf32, #tpu.memory_space<vmem>>, %arg3: memref<10x32xf32, #tpu.memory_space<vmem>>, %arg4: memref<10x10xf32, #tpu.memory_space<vmem>>, %arg5: memref<2x1x32xf32, #tpu.memory_space<vmem>>, %arg6: memref<2x1x32xf32, #tpu.memory_space<vmem>>, %arg7: memref<2x32x96xf32, #tpu.memory_space<vmem>>, %arg8: memref<2x1x96xf32, #tpu.memory_space<vmem>>, %arg9: memref<2x32x32xf32, #tpu.memory_space<vmem>>, %arg10: memref<2x1x32xf32, #tpu.memory_space<vmem>>, %arg11: memref<2x1x32xf32, #tpu.memory_space<vmem>>, %arg12: memref<2x1x32xf32, #tpu.memory_space<vmem>>, %arg13: memref<2x32x64xf32, #tpu.memory_space<vmem>>, %arg14: memref<2x1x64xf32, #tpu.memory_space<vmem>>, %arg15: memref<2x64x32xf32, #tpu.memory_space<vmem>>, %arg16: memref<2x1x32xf32, #tpu.memory_space<vmem>>, %arg17: memref<1x32xf32, #tpu.memory_space<vmem>>, %arg18: memref<1x32xf32, #tpu.memory_space<vmem>>, %arg19: memref<32x128xf32, #tpu.memory_space<vmem>>, %arg20: memref<1x128xf32, #tpu.memory_space<vmem>>, %arg21: memref<2x128xf32, #tpu.memory_space<vmem>>) attributes {dimension_semantics = [#tpu.dimension_semantics<arbitrary>], iteration_bounds = array<i64: 1>, scalar_prefetch = 0 : i64, scratch_operands = 0 : i64, tpu.core_type = #tpu.core_type<tc>, window_params = [{pipeline_mode = #tpu.pipeline_mode<synchronous>, transform_indices = @transform_0, window_bounds = array<i64: 10, 192>}, {pipeline_mode = #tpu.pipeline_mode<synchronous>, transform_indices = @transform_1, window_bounds = array<i64: 192, 32>}, {pipeline_mode = #tpu.pipeline_mode<synchronous>, transform_indices = @transform_2, window_bounds = array<i64: 10, 32>}, {pipeline_mode = #tpu.pipeline_mode<synchronous>, transform_indices = @transform_3, window_bounds = array<i64: 10, 10>}, {pipeline_mode = #tpu.pipeline_mode<synchronous>, transform_indices = @transform_4, window_bounds = array<i64: 2, 1, 32>}, {pipeline_mode = #tpu.pipeline_mode<synchronous>, transform_indices = @transform_5, window_bounds = array<i64: 2, 1, 32>}, {pipeline_mode = #tpu.pipeline_mode<synchronous>, transform_indices = @transform_6, window_bounds = array<i64: 2, 32, 96>}, {pipeline_mode = #tpu.pipeline_mode<synchronous>, transform_indices = @transform_7, window_bounds = array<i64: 2, 1, 96>}, {pipeline_mode = #tpu.pipeline_mode<synchronous>, transform_indices = @transform_8, window_bounds = array<i64: 2, 32, 32>}, {pipeline_mode = #tpu.pipeline_mode<synchronous>, transform_indices = @transform_9, window_bounds = array<i64: 2, 1, 32>}, {pipeline_mode = #tpu.pipeline_mode<synchronous>, transform_indices = @transform_10, window_bounds = array<i64: 2, 1, 32>}, {pipeline_mode = #tpu.pipeline_mode<synchronous>, transform_indices = @transform_11, window_bounds = array<i64: 2, 1, 32>}, {pipeline_mode = #tpu.pipeline_mode<synchronous>, transform_indices = @transform_12, window_bounds = array<i64: 2, 32, 64>}, {pipeline_mode = #tpu.pipeline_mode<synchronous>, transform_indices = @transform_13, window_bounds = array<i64: 2, 1, 64>}, {pipeline_mode = #tpu.pipeline_mode<synchronous>, transform_indices = @transform_14, window_bounds = array<i64: 2, 64, 32>}, {pipeline_mode = #tpu.pipeline_mode<synchronous>, transform_indices = @transform_15, window_bounds = array<i64: 2, 1, 32>}, {pipeline_mode = #tpu.pipeline_mode<synchronous>, transform_indices = @transform_16, window_bounds = array<i64: 1, 32>}, {pipeline_mode = #tpu.pipeline_mode<synchronous>, transform_indices = @transform_17, window_bounds = array<i64: 1, 32>}, {pipeline_mode = #tpu.pipeline_mode<synchronous>, transform_indices = @transform_18, window_bounds = array<i64: 32, 128>}, {pipeline_mode = #tpu.pipeline_mode<synchronous>, transform_indices = @transform_19, window_bounds = array<i64: 1, 128>}, {pipeline_mode = #tpu.pipeline_mode<synchronous>, transform_indices = @transform_20, window_bounds = array<i64: 2, 128>}]} {
    %c0 = arith.constant 0 : index
    %c0_0 = arith.constant 0 : index
    %0 = vector.load %arg4[%c0, %c0_0] : memref<10x10xf32, #tpu.memory_space<vmem>>, vector<10x10xf32>
    %c0_1 = arith.constant 0 : index
    %c0_2 = arith.constant 0 : index
    %1 = vector.load %arg1[%c0_1, %c0_2] : memref<10x192xf32, #tpu.memory_space<vmem>>, vector<10x192xf32>
    %c0_3 = arith.constant 0 : index
    %c0_4 = arith.constant 0 : index
    %2 = vector.load %arg2[%c0_3, %c0_4] : memref<192x32xf32, #tpu.memory_space<vmem>>, vector<192x32xf32>
    %cst = arith.constant dense<0.000000e+00> : vector<10x32xf32>
    %3 = tpu.matmul %1, %2, %cst {dimension_numbers = #tpu.dot_dimension_numbers<[1], [0], [0], [1], [0, 0, 1, 1], [], []>} : vector<10x192xf32>, vector<192x32xf32>, vector<10x32xf32> -> vector<10x32xf32>
    %c0_5 = arith.constant 0 : index
    %c0_6 = arith.constant 0 : index
    %4 = vector.load %arg3[%c0_5, %c0_6] : memref<10x32xf32, #tpu.memory_space<vmem>>, vector<10x32xf32>
    %5 = arith.addf %3, %4 : vector<10x32xf32>
    %c0_7 = arith.constant 0 : index
    %c0_8 = arith.constant 0 : index
    %c0_9 = arith.constant 0 : index
    %6 = vector.load %arg5[%c0_7, %c0_8, %c0_9] : memref<2x1x32xf32, #tpu.memory_space<vmem>>, vector<1x1x32xf32>
    %7 = vector.shape_cast %6 : vector<1x1x32xf32> to vector<1x32xf32>
    %c0_10 = arith.constant 0 : index
    %c0_11 = arith.constant 0 : index
    %c0_12 = arith.constant 0 : index
    %8 = vector.load %arg6[%c0_10, %c0_11, %c0_12] : memref<2x1x32xf32, #tpu.memory_space<vmem>>, vector<1x1x32xf32>
    %9 = vector.shape_cast %8 : vector<1x1x32xf32> to vector<1x32xf32>
    %cst_13 = arith.constant dense<0.000000e+00> : vector<10xf32>
    %10 = vector.multi_reduction <add>, %5, %cst_13 [1] : vector<10x32xf32> to vector<10xf32>
    %11 = vector.shape_cast %10 : vector<10xf32> to vector<10x1xf32>
    %cst_14 = arith.constant 3.200000e+01 : f32
    %12 = vector.broadcast %cst_14 : f32 to vector<10x1xf32>
    %13 = arith.divf %11, %12 : vector<10x1xf32>
    %14 = vector.broadcast %13 : vector<10x1xf32> to vector<10x32xf32>
    %15 = arith.subf %5, %14 : vector<10x32xf32>
    %16 = arith.mulf %15, %15 : vector<10x32xf32>
    %cst_15 = arith.constant dense<0.000000e+00> : vector<10xf32>
    %17 = vector.multi_reduction <add>, %16, %cst_15 [1] : vector<10x32xf32> to vector<10xf32>
    %18 = vector.shape_cast %17 : vector<10xf32> to vector<10x1xf32>
    %cst_16 = arith.constant 3.200000e+01 : f32
    %19 = vector.broadcast %cst_16 : f32 to vector<10x1xf32>
    %20 = arith.divf %18, %19 : vector<10x1xf32>
    %cst_17 = arith.constant 9.99999996E-13 : f32
    %21 = vector.broadcast %cst_17 : f32 to vector<10x1xf32>
    %22 = arith.addf %20, %21 : vector<10x1xf32>
    %23 = math.rsqrt %22 : vector<10x1xf32>
    %24 = vector.broadcast %23 : vector<10x1xf32> to vector<10x32xf32>
    %25 = arith.mulf %15, %24 : vector<10x32xf32>
    %26 = vector.broadcast %7 : vector<1x32xf32> to vector<10x32xf32>
    %27 = arith.mulf %25, %26 : vector<10x32xf32>
    %28 = vector.broadcast %9 : vector<1x32xf32> to vector<10x32xf32>
    %29 = arith.addf %27, %28 : vector<10x32xf32>
    %c0_18 = arith.constant 0 : index
    %c0_19 = arith.constant 0 : index
    %c0_20 = arith.constant 0 : index
    %30 = vector.load %arg7[%c0_18, %c0_19, %c0_20] : memref<2x32x96xf32, #tpu.memory_space<vmem>>, vector<1x32x96xf32>
    %31 = vector.shape_cast %30 : vector<1x32x96xf32> to vector<32x96xf32>
    %cst_21 = arith.constant dense<0.000000e+00> : vector<10x96xf32>
    %32 = tpu.matmul %29, %31, %cst_21 {dimension_numbers = #tpu.dot_dimension_numbers<[1], [0], [0], [1], [0, 0, 1, 1], [], []>} : vector<10x32xf32>, vector<32x96xf32>, vector<10x96xf32> -> vector<10x96xf32>
    %c0_22 = arith.constant 0 : index
    %c0_23 = arith.constant 0 : index
    %c0_24 = arith.constant 0 : index
    %33 = vector.load %arg8[%c0_22, %c0_23, %c0_24] : memref<2x1x96xf32, #tpu.memory_space<vmem>>, vector<1x1x96xf32>
    %34 = vector.shape_cast %33 : vector<1x1x96xf32> to vector<1x96xf32>
    %35 = vector.broadcast %34 : vector<1x96xf32> to vector<10x96xf32>
    %36 = arith.addf %32, %35 : vector<10x96xf32>
    %c0_25 = arith.constant 0 : index
    %c0_26 = arith.constant 0 : index
    %c0_27 = arith.constant 0 : index
    %37 = vector.load %arg9[%c0_25, %c0_26, %c0_27] : memref<2x32x32xf32, #tpu.memory_space<vmem>>, vector<1x32x32xf32>
    %38 = vector.shape_cast %37 : vector<1x32x32xf32> to vector<32x32xf32>
    %c0_28 = arith.constant 0 : index
    %c0_29 = arith.constant 0 : index
    %c0_30 = arith.constant 0 : index
    %39 = vector.load %arg10[%c0_28, %c0_29, %c0_30] : memref<2x1x32xf32, #tpu.memory_space<vmem>>, vector<1x1x32xf32>
    %40 = vector.shape_cast %39 : vector<1x1x32xf32> to vector<1x32xf32>
    %41 = vector.extract_strided_slice %36 {offsets = [0, 0], sizes = [10, 16], strides = [1, 1]} : vector<10x96xf32> to vector<10x16xf32>
    %42 = vector.extract_strided_slice %36 {offsets = [0, 32], sizes = [10, 16], strides = [1, 1]} : vector<10x96xf32> to vector<10x16xf32>
    %43 = vector.extract_strided_slice %36 {offsets = [0, 64], sizes = [10, 16], strides = [1, 1]} : vector<10x96xf32> to vector<10x16xf32>
    %44 = tpu.transpose %42, [1, 0] : vector<10x16xf32> -> vector<16x10xf32>
    %cst_31 = arith.constant dense<0.000000e+00> : vector<10x10xf32>
    %45 = tpu.matmul %41, %44, %cst_31 {dimension_numbers = #tpu.dot_dimension_numbers<[1], [0], [0], [1], [0, 0, 1, 1], [], []>} : vector<10x16xf32>, vector<16x10xf32>, vector<10x10xf32> -> vector<10x10xf32>
    %cst_32 = arith.constant 2.500000e-01 : f32
    %46 = vector.broadcast %cst_32 : f32 to vector<10x10xf32>
    %47 = arith.mulf %45, %46 : vector<10x10xf32>
    %48 = arith.addf %47, %0 : vector<10x10xf32>
    %cst_33 = arith.constant dense<0xFF800000> : vector<10xf32>
    %49 = vector.multi_reduction <maximumf>, %48, %cst_33 [1] : vector<10x10xf32> to vector<10xf32>
    %50 = vector.shape_cast %49 : vector<10xf32> to vector<10x1xf32>
    %51 = vector.broadcast %50 : vector<10x1xf32> to vector<10x10xf32>
    %52 = arith.subf %48, %51 : vector<10x10xf32>
    %53 = math.exp %52 : vector<10x10xf32>
    %cst_34 = arith.constant dense<0.000000e+00> : vector<10xf32>
    %54 = vector.multi_reduction <add>, %53, %cst_34 [1] : vector<10x10xf32> to vector<10xf32>
    %55 = vector.shape_cast %54 : vector<10xf32> to vector<10x1xf32>
    %56 = tpu.reciprocal %55 {approx = true} : vector<10x1xf32> -> vector<10x1xf32>
    %57 = vector.broadcast %56 : vector<10x1xf32> to vector<10x10xf32>
    %58 = arith.mulf %53, %57 : vector<10x10xf32>
    %cst_35 = arith.constant dense<0.000000e+00> : vector<10x16xf32>
    %59 = tpu.matmul %58, %43, %cst_35 {dimension_numbers = #tpu.dot_dimension_numbers<[1], [0], [0], [1], [0, 0, 1, 1], [], []>} : vector<10x10xf32>, vector<10x16xf32>, vector<10x16xf32> -> vector<10x16xf32>
    %60 = vector.extract_strided_slice %38 {offsets = [0, 0], sizes = [16, 32], strides = [1, 1]} : vector<32x32xf32> to vector<16x32xf32>
    %cst_36 = arith.constant dense<0.000000e+00> : vector<10x32xf32>
    %61 = tpu.matmul %59, %60, %cst_36 {dimension_numbers = #tpu.dot_dimension_numbers<[1], [0], [0], [1], [0, 0, 1, 1], [], []>} : vector<10x16xf32>, vector<16x32xf32>, vector<10x32xf32> -> vector<10x32xf32>
    %62 = vector.broadcast %40 : vector<1x32xf32> to vector<10x32xf32>
    %63 = arith.addf %62, %61 : vector<10x32xf32>
    %64 = vector.extract_strided_slice %36 {offsets = [0, 16], sizes = [10, 16], strides = [1, 1]} : vector<10x96xf32> to vector<10x16xf32>
    %65 = vector.extract_strided_slice %36 {offsets = [0, 48], sizes = [10, 16], strides = [1, 1]} : vector<10x96xf32> to vector<10x16xf32>
    %66 = vector.extract_strided_slice %36 {offsets = [0, 80], sizes = [10, 16], strides = [1, 1]} : vector<10x96xf32> to vector<10x16xf32>
    %67 = tpu.transpose %65, [1, 0] : vector<10x16xf32> -> vector<16x10xf32>
    %cst_37 = arith.constant dense<0.000000e+00> : vector<10x10xf32>
    %68 = tpu.matmul %64, %67, %cst_37 {dimension_numbers = #tpu.dot_dimension_numbers<[1], [0], [0], [1], [0, 0, 1, 1], [], []>} : vector<10x16xf32>, vector<16x10xf32>, vector<10x10xf32> -> vector<10x10xf32>
    %cst_38 = arith.constant 2.500000e-01 : f32
    %69 = vector.broadcast %cst_38 : f32 to vector<10x10xf32>
    %70 = arith.mulf %68, %69 : vector<10x10xf32>
    %71 = arith.addf %70, %0 : vector<10x10xf32>
    %cst_39 = arith.constant dense<0xFF800000> : vector<10xf32>
    %72 = vector.multi_reduction <maximumf>, %71, %cst_39 [1] : vector<10x10xf32> to vector<10xf32>
    %73 = vector.shape_cast %72 : vector<10xf32> to vector<10x1xf32>
    %74 = vector.broadcast %73 : vector<10x1xf32> to vector<10x10xf32>
    %75 = arith.subf %71, %74 : vector<10x10xf32>
    %76 = math.exp %75 : vector<10x10xf32>
    %cst_40 = arith.constant dense<0.000000e+00> : vector<10xf32>
    %77 = vector.multi_reduction <add>, %76, %cst_40 [1] : vector<10x10xf32> to vector<10xf32>
    %78 = vector.shape_cast %77 : vector<10xf32> to vector<10x1xf32>
    %79 = tpu.reciprocal %78 {approx = true} : vector<10x1xf32> -> vector<10x1xf32>
    %80 = vector.broadcast %79 : vector<10x1xf32> to vector<10x10xf32>
    %81 = arith.mulf %76, %80 : vector<10x10xf32>
    %cst_41 = arith.constant dense<0.000000e+00> : vector<10x16xf32>
    %82 = tpu.matmul %81, %66, %cst_41 {dimension_numbers = #tpu.dot_dimension_numbers<[1], [0], [0], [1], [0, 0, 1, 1], [], []>} : vector<10x10xf32>, vector<10x16xf32>, vector<10x16xf32> -> vector<10x16xf32>
    %83 = vector.extract_strided_slice %38 {offsets = [16, 0], sizes = [16, 32], strides = [1, 1]} : vector<32x32xf32> to vector<16x32xf32>
    %cst_42 = arith.constant dense<0.000000e+00> : vector<10x32xf32>
    %84 = tpu.matmul %82, %83, %cst_42 {dimension_numbers = #tpu.dot_dimension_numbers<[1], [0], [0], [1], [0, 0, 1, 1], [], []>} : vector<10x16xf32>, vector<16x32xf32>, vector<10x32xf32> -> vector<10x32xf32>
    %85 = arith.addf %63, %84 : vector<10x32xf32>
    %86 = arith.addf %5, %85 : vector<10x32xf32>
    %c0_43 = arith.constant 0 : index
    %c0_44 = arith.constant 0 : index
    %c0_45 = arith.constant 0 : index
    %87 = vector.load %arg11[%c0_43, %c0_44, %c0_45] : memref<2x1x32xf32, #tpu.memory_space<vmem>>, vector<1x1x32xf32>
    %88 = vector.shape_cast %87 : vector<1x1x32xf32> to vector<1x32xf32>
    %c0_46 = arith.constant 0 : index
    %c0_47 = arith.constant 0 : index
    %c0_48 = arith.constant 0 : index
    %89 = vector.load %arg12[%c0_46, %c0_47, %c0_48] : memref<2x1x32xf32, #tpu.memory_space<vmem>>, vector<1x1x32xf32>
    %90 = vector.shape_cast %89 : vector<1x1x32xf32> to vector<1x32xf32>
    %cst_49 = arith.constant dense<0.000000e+00> : vector<10xf32>
    %91 = vector.multi_reduction <add>, %86, %cst_49 [1] : vector<10x32xf32> to vector<10xf32>
    %92 = vector.shape_cast %91 : vector<10xf32> to vector<10x1xf32>
    %cst_50 = arith.constant 3.200000e+01 : f32
    %93 = vector.broadcast %cst_50 : f32 to vector<10x1xf32>
    %94 = arith.divf %92, %93 : vector<10x1xf32>
    %95 = vector.broadcast %94 : vector<10x1xf32> to vector<10x32xf32>
    %96 = arith.subf %86, %95 : vector<10x32xf32>
    %97 = arith.mulf %96, %96 : vector<10x32xf32>
    %cst_51 = arith.constant dense<0.000000e+00> : vector<10xf32>
    %98 = vector.multi_reduction <add>, %97, %cst_51 [1] : vector<10x32xf32> to vector<10xf32>
    %99 = vector.shape_cast %98 : vector<10xf32> to vector<10x1xf32>
    %cst_52 = arith.constant 3.200000e+01 : f32
    %100 = vector.broadcast %cst_52 : f32 to vector<10x1xf32>
    %101 = arith.divf %99, %100 : vector<10x1xf32>
    %cst_53 = arith.constant 9.99999996E-13 : f32
    %102 = vector.broadcast %cst_53 : f32 to vector<10x1xf32>
    %103 = arith.addf %101, %102 : vector<10x1xf32>
    %104 = math.rsqrt %103 : vector<10x1xf32>
    %105 = vector.broadcast %104 : vector<10x1xf32> to vector<10x32xf32>
    %106 = arith.mulf %96, %105 : vector<10x32xf32>
    %107 = vector.broadcast %88 : vector<1x32xf32> to vector<10x32xf32>
    %108 = arith.mulf %106, %107 : vector<10x32xf32>
    %109 = vector.broadcast %90 : vector<1x32xf32> to vector<10x32xf32>
    %110 = arith.addf %108, %109 : vector<10x32xf32>
    %c0_54 = arith.constant 0 : index
    %c0_55 = arith.constant 0 : index
    %c0_56 = arith.constant 0 : index
    %111 = vector.load %arg13[%c0_54, %c0_55, %c0_56] : memref<2x32x64xf32, #tpu.memory_space<vmem>>, vector<1x32x64xf32>
    %112 = vector.shape_cast %111 : vector<1x32x64xf32> to vector<32x64xf32>
    %cst_57 = arith.constant dense<0.000000e+00> : vector<10x64xf32>
    %113 = tpu.matmul %110, %112, %cst_57 {dimension_numbers = #tpu.dot_dimension_numbers<[1], [0], [0], [1], [0, 0, 1, 1], [], []>} : vector<10x32xf32>, vector<32x64xf32>, vector<10x64xf32> -> vector<10x64xf32>
    %c0_58 = arith.constant 0 : index
    %c0_59 = arith.constant 0 : index
    %c0_60 = arith.constant 0 : index
    %114 = vector.load %arg14[%c0_58, %c0_59, %c0_60] : memref<2x1x64xf32, #tpu.memory_space<vmem>>, vector<1x1x64xf32>
    %115 = vector.shape_cast %114 : vector<1x1x64xf32> to vector<1x64xf32>
    %116 = vector.broadcast %115 : vector<1x64xf32> to vector<10x64xf32>
    %117 = arith.addf %113, %116 : vector<10x64xf32>
    %cst_61 = arith.constant 5.000000e-01 : f32
    %118 = vector.broadcast %cst_61 : f32 to vector<10x64xf32>
    %119 = arith.mulf %118, %117 : vector<10x64xf32>
    %cst_62 = arith.constant 4.471500e-02 : f32
    %120 = vector.broadcast %cst_62 : f32 to vector<10x64xf32>
    %121 = arith.mulf %120, %117 : vector<10x64xf32>
    %122 = arith.mulf %121, %117 : vector<10x64xf32>
    %123 = arith.mulf %122, %117 : vector<10x64xf32>
    %124 = arith.addf %117, %123 : vector<10x64xf32>
    %cst_63 = arith.constant 0.797884583 : f32
    %125 = vector.broadcast %cst_63 : f32 to vector<10x64xf32>
    %126 = arith.mulf %125, %124 : vector<10x64xf32>
    %127 = math.tanh %126 : vector<10x64xf32>
    %cst_64 = arith.constant 1.000000e+00 : f32
    %128 = vector.broadcast %cst_64 : f32 to vector<10x64xf32>
    %129 = arith.addf %128, %127 : vector<10x64xf32>
    %130 = arith.mulf %119, %129 : vector<10x64xf32>
    %c0_65 = arith.constant 0 : index
    %c0_66 = arith.constant 0 : index
    %c0_67 = arith.constant 0 : index
    %131 = vector.load %arg15[%c0_65, %c0_66, %c0_67] : memref<2x64x32xf32, #tpu.memory_space<vmem>>, vector<1x64x32xf32>
    %132 = vector.shape_cast %131 : vector<1x64x32xf32> to vector<64x32xf32>
    %cst_68 = arith.constant dense<0.000000e+00> : vector<10x32xf32>
    %133 = tpu.matmul %130, %132, %cst_68 {dimension_numbers = #tpu.dot_dimension_numbers<[1], [0], [0], [1], [0, 0, 1, 1], [], []>} : vector<10x64xf32>, vector<64x32xf32>, vector<10x32xf32> -> vector<10x32xf32>
    %134 = arith.addf %86, %133 : vector<10x32xf32>
    %c0_69 = arith.constant 0 : index
    %c0_70 = arith.constant 0 : index
    %c0_71 = arith.constant 0 : index
    %135 = vector.load %arg16[%c0_69, %c0_70, %c0_71] : memref<2x1x32xf32, #tpu.memory_space<vmem>>, vector<1x1x32xf32>
    %136 = vector.shape_cast %135 : vector<1x1x32xf32> to vector<1x32xf32>
    %137 = vector.broadcast %136 : vector<1x32xf32> to vector<10x32xf32>
    %138 = arith.addf %134, %137 : vector<10x32xf32>
    %c1 = arith.constant 1 : index
    %c0_72 = arith.constant 0 : index
    %c0_73 = arith.constant 0 : index
    %139 = vector.load %arg5[%c1, %c0_72, %c0_73] : memref<2x1x32xf32, #tpu.memory_space<vmem>>, vector<1x1x32xf32>
    %140 = vector.shape_cast %139 : vector<1x1x32xf32> to vector<1x32xf32>
    %c1_74 = arith.constant 1 : index
    %c0_75 = arith.constant 0 : index
    %c0_76 = arith.constant 0 : index
    %141 = vector.load %arg6[%c1_74, %c0_75, %c0_76] : memref<2x1x32xf32, #tpu.memory_space<vmem>>, vector<1x1x32xf32>
    %142 = vector.shape_cast %141 : vector<1x1x32xf32> to vector<1x32xf32>
    %cst_77 = arith.constant dense<0.000000e+00> : vector<10xf32>
    %143 = vector.multi_reduction <add>, %138, %cst_77 [1] : vector<10x32xf32> to vector<10xf32>
    %144 = vector.shape_cast %143 : vector<10xf32> to vector<10x1xf32>
    %cst_78 = arith.constant 3.200000e+01 : f32
    %145 = vector.broadcast %cst_78 : f32 to vector<10x1xf32>
    %146 = arith.divf %144, %145 : vector<10x1xf32>
    %147 = vector.broadcast %146 : vector<10x1xf32> to vector<10x32xf32>
    %148 = arith.subf %138, %147 : vector<10x32xf32>
    %149 = arith.mulf %148, %148 : vector<10x32xf32>
    %cst_79 = arith.constant dense<0.000000e+00> : vector<10xf32>
    %150 = vector.multi_reduction <add>, %149, %cst_79 [1] : vector<10x32xf32> to vector<10xf32>
    %151 = vector.shape_cast %150 : vector<10xf32> to vector<10x1xf32>
    %cst_80 = arith.constant 3.200000e+01 : f32
    %152 = vector.broadcast %cst_80 : f32 to vector<10x1xf32>
    %153 = arith.divf %151, %152 : vector<10x1xf32>
    %cst_81 = arith.constant 9.99999996E-13 : f32
    %154 = vector.broadcast %cst_81 : f32 to vector<10x1xf32>
    %155 = arith.addf %153, %154 : vector<10x1xf32>
    %156 = math.rsqrt %155 : vector<10x1xf32>
    %157 = vector.broadcast %156 : vector<10x1xf32> to vector<10x32xf32>
    %158 = arith.mulf %148, %157 : vector<10x32xf32>
    %159 = vector.broadcast %140 : vector<1x32xf32> to vector<10x32xf32>
    %160 = arith.mulf %158, %159 : vector<10x32xf32>
    %161 = vector.broadcast %142 : vector<1x32xf32> to vector<10x32xf32>
    %162 = arith.addf %160, %161 : vector<10x32xf32>
    %c1_82 = arith.constant 1 : index
    %c0_83 = arith.constant 0 : index
    %c0_84 = arith.constant 0 : index
    %163 = vector.load %arg7[%c1_82, %c0_83, %c0_84] : memref<2x32x96xf32, #tpu.memory_space<vmem>>, vector<1x32x96xf32>
    %164 = vector.shape_cast %163 : vector<1x32x96xf32> to vector<32x96xf32>
    %cst_85 = arith.constant dense<0.000000e+00> : vector<10x96xf32>
    %165 = tpu.matmul %162, %164, %cst_85 {dimension_numbers = #tpu.dot_dimension_numbers<[1], [0], [0], [1], [0, 0, 1, 1], [], []>} : vector<10x32xf32>, vector<32x96xf32>, vector<10x96xf32> -> vector<10x96xf32>
    %c1_86 = arith.constant 1 : index
    %c0_87 = arith.constant 0 : index
    %c0_88 = arith.constant 0 : index
    %166 = vector.load %arg8[%c1_86, %c0_87, %c0_88] : memref<2x1x96xf32, #tpu.memory_space<vmem>>, vector<1x1x96xf32>
    %167 = vector.shape_cast %166 : vector<1x1x96xf32> to vector<1x96xf32>
    %168 = vector.broadcast %167 : vector<1x96xf32> to vector<10x96xf32>
    %169 = arith.addf %165, %168 : vector<10x96xf32>
    %c1_89 = arith.constant 1 : index
    %c0_90 = arith.constant 0 : index
    %c0_91 = arith.constant 0 : index
    %170 = vector.load %arg9[%c1_89, %c0_90, %c0_91] : memref<2x32x32xf32, #tpu.memory_space<vmem>>, vector<1x32x32xf32>
    %171 = vector.shape_cast %170 : vector<1x32x32xf32> to vector<32x32xf32>
    %c1_92 = arith.constant 1 : index
    %c0_93 = arith.constant 0 : index
    %c0_94 = arith.constant 0 : index
    %172 = vector.load %arg10[%c1_92, %c0_93, %c0_94] : memref<2x1x32xf32, #tpu.memory_space<vmem>>, vector<1x1x32xf32>
    %173 = vector.shape_cast %172 : vector<1x1x32xf32> to vector<1x32xf32>
    %174 = vector.extract_strided_slice %169 {offsets = [0, 0], sizes = [10, 16], strides = [1, 1]} : vector<10x96xf32> to vector<10x16xf32>
    %175 = vector.extract_strided_slice %169 {offsets = [0, 32], sizes = [10, 16], strides = [1, 1]} : vector<10x96xf32> to vector<10x16xf32>
    %176 = vector.extract_strided_slice %169 {offsets = [0, 64], sizes = [10, 16], strides = [1, 1]} : vector<10x96xf32> to vector<10x16xf32>
    %177 = tpu.transpose %175, [1, 0] : vector<10x16xf32> -> vector<16x10xf32>
    %cst_95 = arith.constant dense<0.000000e+00> : vector<10x10xf32>
    %178 = tpu.matmul %174, %177, %cst_95 {dimension_numbers = #tpu.dot_dimension_numbers<[1], [0], [0], [1], [0, 0, 1, 1], [], []>} : vector<10x16xf32>, vector<16x10xf32>, vector<10x10xf32> -> vector<10x10xf32>
    %cst_96 = arith.constant 2.500000e-01 : f32
    %179 = vector.broadcast %cst_96 : f32 to vector<10x10xf32>
    %180 = arith.mulf %178, %179 : vector<10x10xf32>
    %181 = arith.addf %180, %0 : vector<10x10xf32>
    %cst_97 = arith.constant dense<0xFF800000> : vector<10xf32>
    %182 = vector.multi_reduction <maximumf>, %181, %cst_97 [1] : vector<10x10xf32> to vector<10xf32>
    %183 = vector.shape_cast %182 : vector<10xf32> to vector<10x1xf32>
    %184 = vector.broadcast %183 : vector<10x1xf32> to vector<10x10xf32>
    %185 = arith.subf %181, %184 : vector<10x10xf32>
    %186 = math.exp %185 : vector<10x10xf32>
    %cst_98 = arith.constant dense<0.000000e+00> : vector<10xf32>
    %187 = vector.multi_reduction <add>, %186, %cst_98 [1] : vector<10x10xf32> to vector<10xf32>
    %188 = vector.shape_cast %187 : vector<10xf32> to vector<10x1xf32>
    %189 = tpu.reciprocal %188 {approx = true} : vector<10x1xf32> -> vector<10x1xf32>
    %190 = vector.broadcast %189 : vector<10x1xf32> to vector<10x10xf32>
    %191 = arith.mulf %186, %190 : vector<10x10xf32>
    %cst_99 = arith.constant dense<0.000000e+00> : vector<10x16xf32>
    %192 = tpu.matmul %191, %176, %cst_99 {dimension_numbers = #tpu.dot_dimension_numbers<[1], [0], [0], [1], [0, 0, 1, 1], [], []>} : vector<10x10xf32>, vector<10x16xf32>, vector<10x16xf32> -> vector<10x16xf32>
    %193 = vector.extract_strided_slice %171 {offsets = [0, 0], sizes = [16, 32], strides = [1, 1]} : vector<32x32xf32> to vector<16x32xf32>
    %cst_100 = arith.constant dense<0.000000e+00> : vector<10x32xf32>
    %194 = tpu.matmul %192, %193, %cst_100 {dimension_numbers = #tpu.dot_dimension_numbers<[1], [0], [0], [1], [0, 0, 1, 1], [], []>} : vector<10x16xf32>, vector<16x32xf32>, vector<10x32xf32> -> vector<10x32xf32>
    %195 = vector.broadcast %173 : vector<1x32xf32> to vector<10x32xf32>
    %196 = arith.addf %195, %194 : vector<10x32xf32>
    %197 = vector.extract_strided_slice %169 {offsets = [0, 16], sizes = [10, 16], strides = [1, 1]} : vector<10x96xf32> to vector<10x16xf32>
    %198 = vector.extract_strided_slice %169 {offsets = [0, 48], sizes = [10, 16], strides = [1, 1]} : vector<10x96xf32> to vector<10x16xf32>
    %199 = vector.extract_strided_slice %169 {offsets = [0, 80], sizes = [10, 16], strides = [1, 1]} : vector<10x96xf32> to vector<10x16xf32>
    %200 = tpu.transpose %198, [1, 0] : vector<10x16xf32> -> vector<16x10xf32>
    %cst_101 = arith.constant dense<0.000000e+00> : vector<10x10xf32>
    %201 = tpu.matmul %197, %200, %cst_101 {dimension_numbers = #tpu.dot_dimension_numbers<[1], [0], [0], [1], [0, 0, 1, 1], [], []>} : vector<10x16xf32>, vector<16x10xf32>, vector<10x10xf32> -> vector<10x10xf32>
    %cst_102 = arith.constant 2.500000e-01 : f32
    %202 = vector.broadcast %cst_102 : f32 to vector<10x10xf32>
    %203 = arith.mulf %201, %202 : vector<10x10xf32>
    %204 = arith.addf %203, %0 : vector<10x10xf32>
    %cst_103 = arith.constant dense<0xFF800000> : vector<10xf32>
    %205 = vector.multi_reduction <maximumf>, %204, %cst_103 [1] : vector<10x10xf32> to vector<10xf32>
    %206 = vector.shape_cast %205 : vector<10xf32> to vector<10x1xf32>
    %207 = vector.broadcast %206 : vector<10x1xf32> to vector<10x10xf32>
    %208 = arith.subf %204, %207 : vector<10x10xf32>
    %209 = math.exp %208 : vector<10x10xf32>
    %cst_104 = arith.constant dense<0.000000e+00> : vector<10xf32>
    %210 = vector.multi_reduction <add>, %209, %cst_104 [1] : vector<10x10xf32> to vector<10xf32>
    %211 = vector.shape_cast %210 : vector<10xf32> to vector<10x1xf32>
    %212 = tpu.reciprocal %211 {approx = true} : vector<10x1xf32> -> vector<10x1xf32>
    %213 = vector.broadcast %212 : vector<10x1xf32> to vector<10x10xf32>
    %214 = arith.mulf %209, %213 : vector<10x10xf32>
    %cst_105 = arith.constant dense<0.000000e+00> : vector<10x16xf32>
    %215 = tpu.matmul %214, %199, %cst_105 {dimension_numbers = #tpu.dot_dimension_numbers<[1], [0], [0], [1], [0, 0, 1, 1], [], []>} : vector<10x10xf32>, vector<10x16xf32>, vector<10x16xf32> -> vector<10x16xf32>
    %216 = vector.extract_strided_slice %171 {offsets = [16, 0], sizes = [16, 32], strides = [1, 1]} : vector<32x32xf32> to vector<16x32xf32>
    %cst_106 = arith.constant dense<0.000000e+00> : vector<10x32xf32>
    %217 = tpu.matmul %215, %216, %cst_106 {dimension_numbers = #tpu.dot_dimension_numbers<[1], [0], [0], [1], [0, 0, 1, 1], [], []>} : vector<10x16xf32>, vector<16x32xf32>, vector<10x32xf32> -> vector<10x32xf32>
    %218 = arith.addf %196, %217 : vector<10x32xf32>
    %219 = arith.addf %138, %218 : vector<10x32xf32>
    %c1_107 = arith.constant 1 : index
    %c0_108 = arith.constant 0 : index
    %c0_109 = arith.constant 0 : index
    %220 = vector.load %arg11[%c1_107, %c0_108, %c0_109] : memref<2x1x32xf32, #tpu.memory_space<vmem>>, vector<1x1x32xf32>
    %221 = vector.shape_cast %220 : vector<1x1x32xf32> to vector<1x32xf32>
    %c1_110 = arith.constant 1 : index
    %c0_111 = arith.constant 0 : index
    %c0_112 = arith.constant 0 : index
    %222 = vector.load %arg12[%c1_110, %c0_111, %c0_112] : memref<2x1x32xf32, #tpu.memory_space<vmem>>, vector<1x1x32xf32>
    %223 = vector.shape_cast %222 : vector<1x1x32xf32> to vector<1x32xf32>
    %cst_113 = arith.constant dense<0.000000e+00> : vector<10xf32>
    %224 = vector.multi_reduction <add>, %219, %cst_113 [1] : vector<10x32xf32> to vector<10xf32>
    %225 = vector.shape_cast %224 : vector<10xf32> to vector<10x1xf32>
    %cst_114 = arith.constant 3.200000e+01 : f32
    %226 = vector.broadcast %cst_114 : f32 to vector<10x1xf32>
    %227 = arith.divf %225, %226 : vector<10x1xf32>
    %228 = vector.broadcast %227 : vector<10x1xf32> to vector<10x32xf32>
    %229 = arith.subf %219, %228 : vector<10x32xf32>
    %230 = arith.mulf %229, %229 : vector<10x32xf32>
    %cst_115 = arith.constant dense<0.000000e+00> : vector<10xf32>
    %231 = vector.multi_reduction <add>, %230, %cst_115 [1] : vector<10x32xf32> to vector<10xf32>
    %232 = vector.shape_cast %231 : vector<10xf32> to vector<10x1xf32>
    %cst_116 = arith.constant 3.200000e+01 : f32
    %233 = vector.broadcast %cst_116 : f32 to vector<10x1xf32>
    %234 = arith.divf %232, %233 : vector<10x1xf32>
    %cst_117 = arith.constant 9.99999996E-13 : f32
    %235 = vector.broadcast %cst_117 : f32 to vector<10x1xf32>
    %236 = arith.addf %234, %235 : vector<10x1xf32>
    %237 = math.rsqrt %236 : vector<10x1xf32>
    %238 = vector.broadcast %237 : vector<10x1xf32> to vector<10x32xf32>
    %239 = arith.mulf %229, %238 : vector<10x32xf32>
    %240 = vector.broadcast %221 : vector<1x32xf32> to vector<10x32xf32>
    %241 = arith.mulf %239, %240 : vector<10x32xf32>
    %242 = vector.broadcast %223 : vector<1x32xf32> to vector<10x32xf32>
    %243 = arith.addf %241, %242 : vector<10x32xf32>
    %c1_118 = arith.constant 1 : index
    %c0_119 = arith.constant 0 : index
    %c0_120 = arith.constant 0 : index
    %244 = vector.load %arg13[%c1_118, %c0_119, %c0_120] : memref<2x32x64xf32, #tpu.memory_space<vmem>>, vector<1x32x64xf32>
    %245 = vector.shape_cast %244 : vector<1x32x64xf32> to vector<32x64xf32>
    %cst_121 = arith.constant dense<0.000000e+00> : vector<10x64xf32>
    %246 = tpu.matmul %243, %245, %cst_121 {dimension_numbers = #tpu.dot_dimension_numbers<[1], [0], [0], [1], [0, 0, 1, 1], [], []>} : vector<10x32xf32>, vector<32x64xf32>, vector<10x64xf32> -> vector<10x64xf32>
    %c1_122 = arith.constant 1 : index
    %c0_123 = arith.constant 0 : index
    %c0_124 = arith.constant 0 : index
    %247 = vector.load %arg14[%c1_122, %c0_123, %c0_124] : memref<2x1x64xf32, #tpu.memory_space<vmem>>, vector<1x1x64xf32>
    %248 = vector.shape_cast %247 : vector<1x1x64xf32> to vector<1x64xf32>
    %249 = vector.broadcast %248 : vector<1x64xf32> to vector<10x64xf32>
    %250 = arith.addf %246, %249 : vector<10x64xf32>
    %cst_125 = arith.constant 5.000000e-01 : f32
    %251 = vector.broadcast %cst_125 : f32 to vector<10x64xf32>
    %252 = arith.mulf %251, %250 : vector<10x64xf32>
    %cst_126 = arith.constant 4.471500e-02 : f32
    %253 = vector.broadcast %cst_126 : f32 to vector<10x64xf32>
    %254 = arith.mulf %253, %250 : vector<10x64xf32>
    %255 = arith.mulf %254, %250 : vector<10x64xf32>
    %256 = arith.mulf %255, %250 : vector<10x64xf32>
    %257 = arith.addf %250, %256 : vector<10x64xf32>
    %cst_127 = arith.constant 0.797884583 : f32
    %258 = vector.broadcast %cst_127 : f32 to vector<10x64xf32>
    %259 = arith.mulf %258, %257 : vector<10x64xf32>
    %260 = math.tanh %259 : vector<10x64xf32>
    %cst_128 = arith.constant 1.000000e+00 : f32
    %261 = vector.broadcast %cst_128 : f32 to vector<10x64xf32>
    %262 = arith.addf %261, %260 : vector<10x64xf32>
    %263 = arith.mulf %252, %262 : vector<10x64xf32>
    %c1_129 = arith.constant 1 : index
    %c0_130 = arith.constant 0 : index
    %c0_131 = arith.constant 0 : index
    %264 = vector.load %arg15[%c1_129, %c0_130, %c0_131] : memref<2x64x32xf32, #tpu.memory_space<vmem>>, vector<1x64x32xf32>
    %265 = vector.shape_cast %264 : vector<1x64x32xf32> to vector<64x32xf32>
    %cst_132 = arith.constant dense<0.000000e+00> : vector<10x32xf32>
    %266 = tpu.matmul %263, %265, %cst_132 {dimension_numbers = #tpu.dot_dimension_numbers<[1], [0], [0], [1], [0, 0, 1, 1], [], []>} : vector<10x64xf32>, vector<64x32xf32>, vector<10x32xf32> -> vector<10x32xf32>
    %267 = arith.addf %219, %266 : vector<10x32xf32>
    %c1_133 = arith.constant 1 : index
    %c0_134 = arith.constant 0 : index
    %c0_135 = arith.constant 0 : index
    %268 = vector.load %arg16[%c1_133, %c0_134, %c0_135] : memref<2x1x32xf32, #tpu.memory_space<vmem>>, vector<1x1x32xf32>
    %269 = vector.shape_cast %268 : vector<1x1x32xf32> to vector<1x32xf32>
    %270 = vector.broadcast %269 : vector<1x32xf32> to vector<10x32xf32>
    %271 = arith.addf %267, %270 : vector<10x32xf32>
    %c0_136 = arith.constant 0 : index
    %c0_137 = arith.constant 0 : index
    %272 = vector.load %arg17[%c0_136, %c0_137] : memref<1x32xf32, #tpu.memory_space<vmem>>, vector<1x32xf32>
    %c0_138 = arith.constant 0 : index
    %c0_139 = arith.constant 0 : index
    %273 = vector.load %arg18[%c0_138, %c0_139] : memref<1x32xf32, #tpu.memory_space<vmem>>, vector<1x32xf32>
    %cst_140 = arith.constant dense<0.000000e+00> : vector<10xf32>
    %274 = vector.multi_reduction <add>, %271, %cst_140 [1] : vector<10x32xf32> to vector<10xf32>
    %275 = vector.shape_cast %274 : vector<10xf32> to vector<10x1xf32>
    %cst_141 = arith.constant 3.200000e+01 : f32
    %276 = vector.broadcast %cst_141 : f32 to vector<10x1xf32>
    %277 = arith.divf %275, %276 : vector<10x1xf32>
    %278 = vector.broadcast %277 : vector<10x1xf32> to vector<10x32xf32>
    %279 = arith.subf %271, %278 : vector<10x32xf32>
    %280 = arith.mulf %279, %279 : vector<10x32xf32>
    %cst_142 = arith.constant dense<0.000000e+00> : vector<10xf32>
    %281 = vector.multi_reduction <add>, %280, %cst_142 [1] : vector<10x32xf32> to vector<10xf32>
    %282 = vector.shape_cast %281 : vector<10xf32> to vector<10x1xf32>
    %cst_143 = arith.constant 3.200000e+01 : f32
    %283 = vector.broadcast %cst_143 : f32 to vector<10x1xf32>
    %284 = arith.divf %282, %283 : vector<10x1xf32>
    %cst_144 = arith.constant 9.99999996E-13 : f32
    %285 = vector.broadcast %cst_144 : f32 to vector<10x1xf32>
    %286 = arith.addf %284, %285 : vector<10x1xf32>
    %287 = math.rsqrt %286 : vector<10x1xf32>
    %288 = vector.broadcast %287 : vector<10x1xf32> to vector<10x32xf32>
    %289 = arith.mulf %279, %288 : vector<10x32xf32>
    %290 = vector.broadcast %272 : vector<1x32xf32> to vector<10x32xf32>
    %291 = arith.mulf %289, %290 : vector<10x32xf32>
    %292 = vector.broadcast %273 : vector<1x32xf32> to vector<10x32xf32>
    %293 = arith.addf %291, %292 : vector<10x32xf32>
    %c0_145 = arith.constant 0 : index
    %c0_146 = arith.constant 0 : index
    %294 = vector.load %arg19[%c0_145, %c0_146] : memref<32x128xf32, #tpu.memory_space<vmem>>, vector<32x128xf32>
    %cst_147 = arith.constant dense<0.000000e+00> : vector<10x128xf32>
    %295 = tpu.matmul %293, %294, %cst_147 {dimension_numbers = #tpu.dot_dimension_numbers<[1], [0], [0], [1], [0, 0, 1, 1], [], []>} : vector<10x32xf32>, vector<32x128xf32>, vector<10x128xf32> -> vector<10x128xf32>
    %c0_148 = arith.constant 0 : index
    %c0_149 = arith.constant 0 : index
    %296 = vector.load %arg20[%c0_148, %c0_149] : memref<1x128xf32, #tpu.memory_space<vmem>>, vector<1x128xf32>
    %297 = vector.broadcast %296 : vector<1x128xf32> to vector<10x128xf32>
    %298 = arith.addf %295, %297 : vector<10x128xf32>
    %299 = vector.extract_strided_slice %298 {offsets = [0, 0], sizes = [1, 128], strides = [1, 1]} : vector<10x128xf32> to vector<1x128xf32>
    %c0_150 = arith.constant 0 : index
    %c0_151 = arith.constant 0 : index
    %300 = vector.load %arg21[%c0_150, %c0_151] : memref<2x128xf32, #tpu.memory_space<vmem>>, vector<1x128xf32>
    tpu.vector_store %arg21[%c0_150, %c0_151], %299 {strides = array<i32>} : memref<2x128xf32, #tpu.memory_space<vmem>>, vector<1x128xf32>,
    %301 = vector.extract_strided_slice %298 {offsets = [5, 0], sizes = [1, 128], strides = [1, 1]} : vector<10x128xf32> to vector<1x128xf32>
    %c1_152 = arith.constant 1 : index
    %c0_153 = arith.constant 0 : index
    %302 = vector.load %arg21[%c1_152, %c0_153] : memref<2x128xf32, #tpu.memory_space<vmem>>, vector<1x128xf32>
    tpu.vector_store %arg21[%c1_152, %c0_153], %301 {strides = array<i32>} : memref<2x128xf32, #tpu.memory_space<vmem>>, vector<1x128xf32>,
    return
  }
  func.func @transform_0(%arg0: i32) -> (i32, i32) {
    %c0_i32 = arith.constant 0 : i32
    %c0_i32_0 = arith.constant 0 : i32
    %c0_i32_1 = arith.constant 0 : i32
    return %c0_i32, %c0_i32_0 : i32, i32
  }
  func.func @transform_1(%arg0: i32) -> (i32, i32) {
    %c0_i32 = arith.constant 0 : i32
    %c0_i32_0 = arith.constant 0 : i32
    %c0_i32_1 = arith.constant 0 : i32
    return %c0_i32, %c0_i32_0 : i32, i32
  }
  func.func @transform_2(%arg0: i32) -> (i32, i32) {
    %c0_i32 = arith.constant 0 : i32
    %c0_i32_0 = arith.constant 0 : i32
    %c0_i32_1 = arith.constant 0 : i32
    return %c0_i32, %c0_i32_0 : i32, i32
  }
  func.func @transform_3(%arg0: i32) -> (i32, i32) {
    %c0_i32 = arith.constant 0 : i32
    %c0_i32_0 = arith.constant 0 : i32
    %c0_i32_1 = arith.constant 0 : i32
    return %c0_i32, %c0_i32_0 : i32, i32
  }
  func.func @transform_4(%arg0: i32) -> (i32, i32, i32) {
    %c0_i32 = arith.constant 0 : i32
    %c0_i32_0 = arith.constant 0 : i32
    %c0_i32_1 = arith.constant 0 : i32
    %c0_i32_2 = arith.constant 0 : i32
    return %c0_i32, %c0_i32_0, %c0_i32_1 : i32, i32, i32
  }
  func.func @transform_5(%arg0: i32) -> (i32, i32, i32) {
    %c0_i32 = arith.constant 0 : i32
    %c0_i32_0 = arith.constant 0 : i32
    %c0_i32_1 = arith.constant 0 : i32
    %c0_i32_2 = arith.constant 0 : i32
    return %c0_i32, %c0_i32_0, %c0_i32_1 : i32, i32, i32
  }
  func.func @transform_6(%arg0: i32) -> (i32, i32, i32) {
    %c0_i32 = arith.constant 0 : i32
    %c0_i32_0 = arith.constant 0 : i32
    %c0_i32_1 = arith.constant 0 : i32
    %c0_i32_2 = arith.constant 0 : i32
    return %c0_i32, %c0_i32_0, %c0_i32_1 : i32, i32, i32
  }
  func.func @transform_7(%arg0: i32) -> (i32, i32, i32) {
    %c0_i32 = arith.constant 0 : i32
    %c0_i32_0 = arith.constant 0 : i32
    %c0_i32_1 = arith.constant 0 : i32
    %c0_i32_2 = arith.constant 0 : i32
    return %c0_i32, %c0_i32_0, %c0_i32_1 : i32, i32, i32
  }
  func.func @transform_8(%arg0: i32) -> (i32, i32, i32) {
    %c0_i32 = arith.constant 0 : i32
    %c0_i32_0 = arith.constant 0 : i32
    %c0_i32_1 = arith.constant 0 : i32
    %c0_i32_2 = arith.constant 0 : i32
    return %c0_i32, %c0_i32_0, %c0_i32_1 : i32, i32, i32
  }
  func.func @transform_9(%arg0: i32) -> (i32, i32, i32) {
    %c0_i32 = arith.constant 0 : i32
    %c0_i32_0 = arith.constant 0 : i32
    %c0_i32_1 = arith.constant 0 : i32
    %c0_i32_2 = arith.constant 0 : i32
    return %c0_i32, %c0_i32_0, %c0_i32_1 : i32, i32, i32
  }
  func.func @transform_10(%arg0: i32) -> (i32, i32, i32) {
    %c0_i32 = arith.constant 0 : i32
    %c0_i32_0 = arith.constant 0 : i32
    %c0_i32_1 = arith.constant 0 : i32
    %c0_i32_2 = arith.constant 0 : i32
    return %c0_i32, %c0_i32_0, %c0_i32_1 : i32, i32, i32
  }
  func.func @transform_11(%arg0: i32) -> (i32, i32, i32) {
    %c0_i32 = arith.constant 0 : i32
    %c0_i32_0 = arith.constant 0 : i32
    %c0_i32_1 = arith.constant 0 : i32
    %c0_i32_2 = arith.constant 0 : i32
    return %c0_i32, %c0_i32_0, %c0_i32_1 : i32, i32, i32
  }
  func.func @transform_12(%arg0: i32) -> (i32, i32, i32) {
    %c0_i32 = arith.constant 0 : i32
    %c0_i32_0 = arith.constant 0 : i32
    %c0_i32_1 = arith.constant 0 : i32
    %c0_i32_2 = arith.constant 0 : i32
    return %c0_i32, %c0_i32_0, %c0_i32_1 : i32, i32, i32
  }
  func.func @transform_13(%arg0: i32) -> (i32, i32, i32) {
    %c0_i32 = arith.constant 0 : i32
    %c0_i32_0 = arith.constant 0 : i32
    %c0_i32_1 = arith.constant 0 : i32
    %c0_i32_2 = arith.constant 0 : i32
    return %c0_i32, %c0_i32_0, %c0_i32_1 : i32, i32, i32
  }
  func.func @transform_14(%arg0: i32) -> (i32, i32, i32) {
    %c0_i32 = arith.constant 0 : i32
    %c0_i32_0 = arith.constant 0 : i32
    %c0_i32_1 = arith.constant 0 : i32
    %c0_i32_2 = arith.constant 0 : i32
    return %c0_i32, %c0_i32_0, %c0_i32_1 : i32, i32, i32
  }
  func.func @transform_15(%arg0: i32) -> (i32, i32, i32) {
    %c0_i32 = arith.constant 0 : i32
    %c0_i32_0 = arith.constant 0 : i32
    %c0_i32_1 = arith.constant 0 : i32
    %c0_i32_2 = arith.constant 0 : i32
    return %c0_i32, %c0_i32_0, %c0_i32_1 : i32, i32, i32
  }
  func.func @transform_16(%arg0: i32) -> (i32, i32) {
    %c0_i32 = arith.constant 0 : i32
    %c0_i32_0 = arith.constant 0 : i32
    %c0_i32_1 = arith.constant 0 : i32
    return %c0_i32, %c0_i32_0 : i32, i32
  }
  func.func @transform_17(%arg0: i32) -> (i32, i32) {
    %c0_i32 = arith.constant 0 : i32
    %c0_i32_0 = arith.constant 0 : i32
    %c0_i32_1 = arith.constant 0 : i32
    return %c0_i32, %c0_i32_0 : i32, i32
  }
  func.func @transform_18(%arg0: i32) -> (i32, i32) {
    %c0_i32 = arith.constant 0 : i32
    %c0_i32_0 = arith.constant 0 : i32
    %c0_i32_1 = arith.constant 0 : i32
    return %c0_i32, %c0_i32_0 : i32, i32
  }
  func.func @transform_19(%arg0: i32) -> (i32, i32) {
    %c0_i32 = arith.constant 0 : i32
    %c0_i32_0 = arith.constant 0 : i32
    %c0_i32_1 = arith.constant 0 : i32
    return %c0_i32, %c0_i32_0 : i32, i32
  }
  func.func @transform_20(%arg0: i32) -> (i32, i32) {
    %c0_i32 = arith.constant 0 : i32
    %c0_i32_0 = arith.constant 0 : i32
    %c0_i32_1 = arith.constant 0 : i32
    return %c0_i32, %c0_i32_0 : i32, i32
  }
}

</mosaic_0001>

<llo_original>
// kernel: fwd.1
$region0: #{fwd.1}
  #allocation0 [shape = 'u32[]', space=smem, size = 0x4, offset = 0x4, fixed_abs, tag = 'smem constant byte address 0x4 - core index']
  #allocation1 [shape = 'u32[144,128]{1,0:T(1,128)}', space=vmem, size = 0x12000, scoped, tag = 'internal scratch']
  %s0 = inlined_call_operand.vmem [shape: f32[10,192], index: 0, kind: input, shape index: {}]
  %s1 = inlined_call_operand.vmem [shape: f32[192,32], index: 1, kind: input, shape index: {}]
  %s2 = inlined_call_operand.vmem [shape: f32[10,32], index: 2, kind: input, shape index: {}]
  %s3 = inlined_call_operand.vmem [shape: f32[10,10], index: 3, kind: input, shape index: {}]
  %s4 = inlined_call_operand.vmem [shape: f32[2,1,32], index: 4, kind: input, shape index: {}]
  %s5 = inlined_call_operand.vmem [shape: f32[2,1,32], index: 5, kind: input, shape index: {}]
  %s6 = inlined_call_operand.vmem [shape: f32[2,32,96], index: 6, kind: input, shape index: {}]
  %s7 = inlined_call_operand.vmem [shape: f32[2,1,96], index: 7, kind: input, shape index: {}]
  %s8 = inlined_call_operand.vmem [shape: f32[2,32,32], index: 8, kind: input, shape index: {}]
  %s9 = inlined_call_operand.vmem [shape: f32[2,1,32], index: 9, kind: input, shape index: {}]
  %s10 = inlined_call_operand.vmem [shape: f32[2,1,32], index: 10, kind: input, shape index: {}]
  %s11 = inlined_call_operand.vmem [shape: f32[2,1,32], index: 11, kind: input, shape index: {}]
  %s12 = inlined_call_operand.vmem [shape: f32[2,32,64], index: 12, kind: input, shape index: {}]
  %s13 = inlined_call_operand.vmem [shape: f32[2,1,64], index: 13, kind: input, shape index: {}]
  %s14 = inlined_call_operand.vmem [shape: f32[2,64,32], index: 14, kind: input, shape index: {}]
  %s15 = inlined_call_operand.vmem [shape: f32[2,1,32], index: 15, kind: input, shape index: {}]
  %s16 = inlined_call_operand.vmem [shape: f32[1,32], index: 16, kind: input, shape index: {}]
  %s17 = inlined_call_operand.vmem [shape: f32[1,32], index: 17, kind: input, shape index: {}]
  %s18 = inlined_call_operand.vmem [shape: f32[32,128], index: 18, kind: input, shape index: {}]
  %s19 = inlined_call_operand.vmem [shape: f32[1,128], index: 19, kind: input, shape index: {}]
  %s20 = inlined_call_operand.hbm [shape: f32[2,128], index: 20, kind: output, shape index: {}]
  %s21 = sld [smem:[#allocation0]]
  $region90: #{fwd.1} parent=0
    _
  %s23 = ssub.s32 1, %s21
  %s24 = scalar_select 0, %s23, %s21
  $region1: #{fwd.1} parent=0
    #allocation2 [shape = 'u8[1024]{0}', space=vmem, size = 0x400, scoped, tag = 'output window, operand 0, single buffered']
    #allocation3 [shape = 's32[1]{0}', space=sflag, size = 0x4, scoped, tag = 'scoped memory for fwd.1']
    %25 = vsyncpa [#allocation3], 0
    // Predicated region
    $region2: #{fwd.1} parent=1 // pred_check
      _
    $region3: #{fwd.1} parent=1 // pred_check_branch
      %27 = sbr.rel (0) target = $region5
    $region4: #{fwd.1} parent=1 // pred_region
      _
    $region5: #{fwd.1} parent=1 // pred_fallthru
      _
    // Predicated region
    $region6: #{fwd.1} parent=1 // pred_check
      _
    $region7: #{fwd.1} parent=1 // pred_check_branch
      %29 = sbr.rel (0) target = $region9
    $region8: #{fwd.1} parent=1 // pred_region
      _
    $region9: #{fwd.1} parent=1 // pred_fallthru
      _
    // Predicated region
    $region10: #{fwd.1} parent=1 // pred_check
      _
    $region11: #{fwd.1} parent=1 // pred_check_branch
      %31 = sbr.rel (0) target = $region13
    $region12: #{fwd.1} parent=1 // pred_region
      _
    $region13: #{fwd.1} parent=1 // pred_fallthru
      _
    // Predicated region
    $region14: #{fwd.1} parent=1 // pred_check
      _
    $region15: #{fwd.1} parent=1 // pred_check_branch
      %33 = sbr.rel (0) target = $region17
    $region16: #{fwd.1} parent=1 // pred_region
      _
    $region17: #{fwd.1} parent=1 // pred_fallthru
      _
    // Predicated region
    $region18: #{fwd.1} parent=1 // pred_check
      _
    $region19: #{fwd.1} parent=1 // pred_check_branch
      %35 = sbr.rel (0) target = $region21
    $region20: #{fwd.1} parent=1 // pred_region
      _
    $region21: #{fwd.1} parent=1 // pred_fallthru
      _
    // Predicated region
    $region22: #{fwd.1} parent=1 // pred_check
      _
    $region23: #{fwd.1} parent=1 // pred_check_branch
      %37 = sbr.rel (0) target = $region25
    $region24: #{fwd.1} parent=1 // pred_region
      _
    $region25: #{fwd.1} parent=1 // pred_fallthru
      _
    // Predicated region
    $region26: #{fwd.1} parent=1 // pred_check
      _
    $region27: #{fwd.1} parent=1 // pred_check_branch
      %39 = sbr.rel (0) target = $region29
    $region28: #{fwd.1} parent=1 // pred_region
      _
    $region29: #{fwd.1} parent=1 // pred_fallthru
      _
    // Predicated region
    $region30: #{fwd.1} parent=1 // pred_check
      _
    $region31: #{fwd.1} parent=1 // pred_check_branch
      %41 = sbr.rel (0) target = $region33
    $region32: #{fwd.1} parent=1 // pred_region
      _
    $region33: #{fwd.1} parent=1 // pred_fallthru
      _
    // Predicated region
    $region34: #{fwd.1} parent=1 // pred_check
      _
    $region35: #{fwd.1} parent=1 // pred_check_branch
      %43 = sbr.rel (0) target = $region37
    $region36: #{fwd.1} parent=1 // pred_region
      _
    $region37: #{fwd.1} parent=1 // pred_fallthru
      _
    // Predicated region
    $region38: #{fwd.1} parent=1 // pred_check
      _
    $region39: #{fwd.1} parent=1 // pred_check_branch
      %45 = sbr.rel (0) target = $region41
    $region40: #{fwd.1} parent=1 // pred_region
      _
    $region41: #{fwd.1} parent=1 // pred_fallthru
      _
    // Predicated region
    $region42: #{fwd.1} parent=1 // pred_check
      _
    $region43: #{fwd.1} parent=1 // pred_check_branch
      %47 = sbr.rel (0) target = $region45
    $region44: #{fwd.1} parent=1 // pred_region
      _
    $region45: #{fwd.1} parent=1 // pred_fallthru
      _
    // Predicated region
    $region46: #{fwd.1} parent=1 // pred_check
      _
    $region47: #{fwd.1} parent=1 // pred_check_branch
      %49 = sbr.rel (0) target = $region49
    $region48: #{fwd.1} parent=1 // pred_region
      _
    $region49: #{fwd.1} parent=1 // pred_fallthru
      _
    // Predicated region
    $region50: #{fwd.1} parent=1 // pred_check
      _
    $region51: #{fwd.1} parent=1 // pred_check_branch
      %51 = sbr.rel (0) target = $region53
    $region52: #{fwd.1} parent=1 // pred_region
      _
    $region53: #{fwd.1} parent=1 // pred_fallthru
      _
    // Predicated region
    $region54: #{fwd.1} parent=1 // pred_check
      _
    $region55: #{fwd.1} parent=1 // pred_check_branch
      %53 = sbr.rel (0) target = $region57
    $region56: #{fwd.1} parent=1 // pred_region
      _
    $region57: #{fwd.1} parent=1 // pred_fallthru
      _
    // Predicated region
    $region58: #{fwd.1} parent=1 // pred_check
      _
    $region59: #{fwd.1} parent=1 // pred_check_branch
      %55 = sbr.rel (0) target = $region61
    $region60: #{fwd.1} parent=1 // pred_region
      _
    $region61: #{fwd.1} parent=1 // pred_fallthru
      _
    // Predicated region
    $region62: #{fwd.1} parent=1 // pred_check
      _
    $region63: #{fwd.1} parent=1 // pred_check_branch
      %57 = sbr.rel (0) target = $region65
    $region64: #{fwd.1} parent=1 // pred_region
      _
    $region65: #{fwd.1} parent=1 // pred_fallthru
      _
    // Predicated region
    $region66: #{fwd.1} parent=1 // pred_check
      _
    $region67: #{fwd.1} parent=1 // pred_check_branch
      %59 = sbr.rel (0) target = $region69
    $region68: #{fwd.1} parent=1 // pred_region
      _
    $region69: #{fwd.1} parent=1 // pred_fallthru
      _
    // Predicated region
    $region70: #{fwd.1} parent=1 // pred_check
      _
    $region71: #{fwd.1} parent=1 // pred_check_branch
      %61 = sbr.rel (0) target = $region73
    $region72: #{fwd.1} parent=1 // pred_region
      _
    $region73: #{fwd.1} parent=1 // pred_fallthru
      _
    // Predicated region
    $region74: #{fwd.1} parent=1 // pred_check
      _
    $region75: #{fwd.1} parent=1 // pred_check_branch
      %63 = sbr.rel (0) target = $region77
    $region76: #{fwd.1} parent=1 // pred_region
      _
    $region77: #{fwd.1} parent=1 // pred_fallthru
      _
    // Predicated region
    $region78: #{fwd.1} parent=1 // pred_check
      _
    $region79: #{fwd.1} parent=1 // pred_check_branch
      %65 = sbr.rel (0) target = $region81
    $region80: #{fwd.1} parent=1 // pred_region
      _
    $region81: #{fwd.1} parent=1 // pred_fallthru
      _
    %v66 = vld [vmem:[%s3] sm:$0xff]
    %v67 = vld [vmem:[%s3 + $0x8] sm:$0x3]
    %v68 = vld [vmem:[%s0] sm:$0xff]
    %v69 = vld [vmem:[%s0 + $0x8] sm:$0xff]
    %v70 = vld [vmem:[%s0 + $0x10] sm:$0x3]
    %v71 = vld [vmem:[%s0 + $0x18] sm:$0x3]
    %v72 = vld [vmem:[%s1] sm:$0xff]
    %v73 = vld [vmem:[%s1 + $0x8] sm:$0xff]
    %v74 = vld [vmem:[%s1 + $0x10] sm:$0xff]
    %v75 = vld [vmem:[%s1 + $0x18] sm:$0xff]
    %v76 = vld [vmem:[%s1 + $0x20] sm:$0xff]
    %v77 = vld [vmem:[%s1 + $0x28] sm:$0xff]
    %v78 = vld [vmem:[%s1 + $0x30] sm:$0xff]
    %v79 = vld [vmem:[%s1 + $0x38] sm:$0xff]
    %v80 = vld [vmem:[%s1 + $0x40] sm:$0xff]
    %v81 = vld [vmem:[%s1 + $0x48] sm:$0xff]
    %v82 = vld [vmem:[%s1 + $0x50] sm:$0xff]
    %v83 = vld [vmem:[%s1 + $0x58] sm:$0xff]
    %v84 = vld [vmem:[%s1 + $0x60] sm:$0xff]
    %v85 = vld [vmem:[%s1 + $0x68] sm:$0xff]
    %v86 = vld [vmem:[%s1 + $0x70] sm:$0xff]
    %v87 = vld [vmem:[%s1 + $0x78] sm:$0xff]
    %v88 = vld [vmem:[%s1 + $0x80] sm:$0xff]
    %v89 = vld [vmem:[%s1 + $0x88] sm:$0xff]
    %v90 = vld [vmem:[%s1 + $0x90] sm:$0xff]
    %v91 = vld [vmem:[%s1 + $0x98] sm:$0xff]
    %v92 = vld [vmem:[%s1 + $0xa0] sm:$0xff]
    %v93 = vld [vmem:[%s1 + $0xa8] sm:$0xff]
    %v94 = vld [vmem:[%s1 + $0xb0] sm:$0xff]
    %v95 = vld [vmem:[%s1 + $0xb8] sm:$0xff]
    %v96 = vld [vmem:[%s2] sm:$0xff]
    %v97 = vld [vmem:[%s2 + $0x8] sm:$0x3]
    %vm98 = vcmask 523264
    %v100 = vsel %vm98, %v69, 0
    %v103 = vsel %vm98, %v71, 0
    %105 = vmatprep.subr.mxu0 0.0
    %106 = vmatpush1.msra.mxu0 %v72
    %107 = vmatprep.subr.mxu0 0.0
    %108 = vmatpush1.msra.mxu0 %v73
    %109 = vmatprep.subr.mxu0 0.0
    %110 = vmatpush1.msra.mxu0 %v74
    %111 = vmatprep.subr.mxu0 0.0
    %112 = vmatpush1.msra.mxu0 %v75
    %113 = vmatprep.subr.mxu0 0.0
    %114 = vmatpush1.msra.mxu0 %v76
    %115 = vmatprep.subr.mxu0 0.0
    %116 = vmatpush1.msra.mxu0 %v77
    %117 = vmatprep.subr.mxu0 0.0
    %118 = vmatpush1.msra.mxu0 %v78
    %119 = vmatprep.subr.mxu0 0.0
    %120 = vmatpush1.msra.mxu0 %v79
    %121 = vmatprep.subr.mxu0 0.0
    %122 = vmatpush1.msra.mxu0 %v80
    %123 = vmatprep.subr.mxu0 0.0
    %124 = vmatpush1.msra.mxu0 %v81
    %125 = vmatprep.subr.mxu0 0.0
    %126 = vmatpush1.msra.mxu0 %v82
    %127 = vmatprep.subr.mxu0 0.0
    %128 = vmatpush1.msra.mxu0 %v83
    %129 = vmatprep.subr.mxu0 0.0
    %130 = vmatpush1.msra.mxu0 %v84
    %131 = vmatprep.subr.mxu0 0.0
    %132 = vmatpush1.msra.mxu0 %v85
    %133 = vmatprep.subr.mxu0 0.0
    %134 = vmatpush1.msra.mxu0 %v86
    %135 = vmatprep.subr.mxu0 0.0
    %136 = vmatpush1.msra.mxu0 %v87
    %137 = vmatprep.subr.mxu0 0.0
    %138 = vmatpush1.msra.mxu0 %v88
    %139 = vmatprep.subr.mxu0 0.0
    %140 = vmatpush1.msra.mxu0 %v89
    %141 = vmatprep.subr.mxu0 0.0
    %142 = vmatpush1.msra.mxu0 %v90
    %143 = vmatprep.subr.mxu0 0.0
    %144 = vmatpush1.msra.mxu0 %v91
    %145 = vmatprep.subr.mxu0 0.0
    %146 = vmatpush1.msra.mxu0 %v92
    %147 = vmatprep.subr.mxu0 0.0
    %148 = vmatpush1.msra.mxu0 %v93
    %149 = vmatprep.subr.mxu0 0.0
    %150 = vmatpush1.msra.mxu0 %v94
    %151 = vmatprep.subr.mxu0 0.0
    %152 = vmatpush1.msra.mxu0 %v95
    %153 = vmatprep.subr.mxu0 0.0
    %154 = vmatpush1.msra.mxu0 0.0
    %155 = vmatprep.subr.mxu0 0.0
    %156 = vmatpush1.msra.mxu0 0.0
    %157 = vmatprep.subr.mxu0 0.0
    %158 = vmatpush1.msra.mxu0 0.0
    %159 = vmatprep.subr.mxu0 0.0
    %160 = vmatpush1.msra.mxu0 0.0
    %161 = vmatprep.subr.mxu0 0.0
    %162 = vmatpush1.msra.mxu0 0.0
    %163 = vmatprep.subr.mxu0 0.0
    %164 = vmatpush1.msra.mxu0 0.0
    %165 = vmatprep.subr.mxu0 0.0
    %166 = vmatpush1.msra.mxu0 0.0
    %167 = vmatprep.subr.mxu0 0.0
    %168 = vmatpush1.msra.mxu0 0.0
    %169 = vmatprep.mubr.f32.mxu0 %v100
    %170 = vmatmul.mubr.f32.gmra.mrb[0].mxu0 %v68
    %v171 = vpop.f32.mrb[0].mxu0
    %v172 = vadd.f32 %v96, %v171
    %v173 = vpop.f32.mrb[0].mxu0
    %174 = vmatprep.mubr.f32.mxu0 %v103
    %175 = vmatmul.mubr.f32.gmra.mrb[0].mxu0 %v70
    %v176 = vpop.f32.mrb[0].mxu0
    %v177 = vadd.f32 %v97, %v176
    %v178 = vpop.f32.mrb[0].mxu0
    %179 = vdwg.mxu0
    %v180 = vld [vmem:[%s4] sm:$0x1]
    %v181 = vld [vmem:[%s5] sm:$0x1]
    %vm182 = vcmask 261120
    %v183 = vsel %vm182, %v172, 0.0
    %184 = vadd.xlane.f32.xlu0 %v183
    %v185 = vpop.xlane.xlu0 %184
    %vm186 = vcmask 254976
    %v187 = vsel %vm186, %v177, 0.0
    %188 = vadd.xlane.f32.xlu0 %v187
    %v189 = vpop.xlane.xlu0 %188
    %v190 = vrcp.pop 32.0
    %v191 = vmul.f32 %v185, %v190
    %v192 = vmul.f32 %v189, %v190
    %v193 = vsub.f32 %v172, %v191
    %v194 = vsub.f32 %v177, %v192
    %v195 = vmul.f32 %v193, %v193
    %v196 = vmul.f32 %v194, %v194
    %v197 = vsel %vm182, %v195, 0.0
    %198 = vadd.xlane.f32.xlu0 %v197
    %v199 = vpop.xlane.xlu0 %198
    %v200 = vsel %vm186, %v196, 0.0
    %201 = vadd.xlane.f32.xlu0 %v200
    %v202 = vpop.xlane.xlu0 %201
    %v203 = vmul.f32 %v199, %v190
    %v204 = vmul.f32 %v202, %v190
    %v205 = vadd.f32 %v203, 1e-12
    %v206 = vadd.f32 %v204, 1e-12
    %v207 = vrsqrt.pop %v205
    %v208 = vrsqrt.pop %v206
    %v209 = vmul.f32 %v193, %v207
    %v210 = vmul.f32 %v194, %v208
    %v212 = vlaneseq
    %v213 = vshrl.u32 %v212, 7
    %v214 = vsub.s32 0, %v213
    %v215 = vrot.slane %v180, %v214
    %v217 = vmul.f32 %v209, %v215
    %v218 = vmul.f32 %v210, %v215
    %v220 = vlaneseq
    %v221 = vshrl.u32 %v220, 7
    %v222 = vsub.s32 0, %v221
    %v223 = vrot.slane %v181, %v222
    %v225 = vadd.f32 %v217, %v223
    %v226 = vadd.f32 %v218, %v223
    %v227 = vld [vmem:[%s6] sm:$0xff]
    %v228 = vld [vmem:[%s6 + $0x8] sm:$0xff]
    %v229 = vld [vmem:[%s6 + $0x10] sm:$0xff]
    %v230 = vld [vmem:[%s6 + $0x18] sm:$0xff]
    %v231 = vld [vmem:[%s7] sm:$0x1]
    %v233 = vlaneseq
    %v234 = vshrl.u32 %v233, 7
    %v235 = vsub.s32 0, %v234
    %v236 = vrot.slane %v231, %v235
    %v239 = vsel %vm182, %v225, 0
    %v242 = vsel %vm182, %v226, 0
    %244 = vmatprep.subr.mxu0 0.0
    %245 = vmatpush1.msra.mxu0 %v227
    %246 = vmatprep.subr.mxu0 0.0
    %247 = vmatpush1.msra.mxu0 %v228
    %248 = vmatprep.subr.mxu0 0.0
    %249 = vmatpush1.msra.mxu0 %v229
    %250 = vmatprep.subr.mxu0 0.0
    %251 = vmatpush1.msra.mxu0 %v230
    %252 = vmatprep.subr.mxu0 0.0
    %253 = vmatpush1.msra.mxu0 0.0
    %254 = vmatprep.subr.mxu0 0.0
    %255 = vmatpush1.msra.mxu0 0.0
    %256 = vmatprep.subr.mxu0 0.0
    %257 = vmatpush1.msra.mxu0 0.0
    %258 = vmatprep.subr.mxu0 0.0
    %259 = vmatpush1.msra.mxu0 0.0
    %260 = vmatprep.subr.mxu0 0.0
    %261 = vmatpush1.msra.mxu0 0.0
    %262 = vmatprep.subr.mxu0 0.0
    %263 = vmatpush1.msra.mxu0 0.0
    %264 = vmatprep.subr.mxu0 0.0
    %265 = vmatpush1.msra.mxu0 0.0
    %266 = vmatprep.subr.mxu0 0.0
    %267 = vmatpush1.msra.mxu0 0.0
    %268 = vmatprep.subr.mxu0 0.0
    %269 = vmatpush1.msra.mxu0 0.0
    %270 = vmatprep.subr.mxu0 0.0
    %271 = vmatpush1.msra.mxu0 0.0
    %272 = vmatprep.subr.mxu0 0.0
    %273 = vmatpush1.msra.mxu0 0.0
    %274 = vmatprep.subr.mxu0 0.0
    %275 = vmatpush1.msra.mxu0 0.0
    %276 = vmatprep.subr.mxu0 0.0
    %277 = vmatpush1.msra.mxu0 0.0
    %278 = vmatprep.subr.mxu0 0.0
    %279 = vmatpush1.msra.mxu0 0.0
    %280 = vmatprep.subr.mxu0 0.0
    %281 = vmatpush1.msra.mxu0 0.0
    %282 = vmatprep.subr.mxu0 0.0
    %283 = vmatpush1.msra.mxu0 0.0
    %284 = vmatprep.subr.mxu0 0.0
    %285 = vmatpush1.msra.mxu0 0.0
    %286 = vmatprep.subr.mxu0 0.0
    %287 = vmatpush1.msra.mxu0 0.0
    %288 = vmatprep.subr.mxu0 0.0
    %289 = vmatpush1.msra.mxu0 0.0
    %290 = vmatprep.subr.mxu0 0.0
    %291 = vmatpush1.msra.mxu0 0.0
    %292 = vmatprep.subr.mxu0 0.0
    %293 = vmatpush1.msra.mxu0 0.0
    %294 = vmatprep.subr.mxu0 0.0
    %295 = vmatpush1.msra.mxu0 0.0
    %296 = vmatprep.subr.mxu0 0.0
    %297 = vmatpush1.msra.mxu0 0.0
    %298 = vmatprep.subr.mxu0 0.0
    %299 = vmatpush1.msra.mxu0 0.0
    %300 = vmatprep.subr.mxu0 0.0
    %301 = vmatpush1.msra.mxu0 0.0
    %302 = vmatprep.subr.mxu0 0.0
    %303 = vmatpush1.msra.mxu0 0.0
    %304 = vmatprep.subr.mxu0 0.0
    %305 = vmatpush1.msra.mxu0 0.0
    %306 = vmatprep.subr.mxu0 0.0
    %307 = vmatpush1.msra.mxu0 0.0
    %308 = vmatprep.mubr.f32.mxu0 0.0
    %309 = vmatmul.mubr.f32.gmra.mrb[0].mxu0 %v239
    %v310 = vpop.f32.mrb[0].mxu0
    %v311 = vadd.f32 %v236, %v310
    %v312 = vpop.f32.mrb[0].mxu0
    %313 = vmatprep.mubr.f32.mxu0 0.0
    %314 = vmatmul.mubr.f32.gmra.mrb[0].mxu0 %v242
    %v315 = vpop.f32.mrb[0].mxu0
    %v316 = vadd.f32 %v236, %v315
    %v317 = vpop.f32.mrb[0].mxu0
    %318 = vdwg.mxu0
    %v319 = vld [vmem:[%s8] sm:$0xff]
    %v320 = vld [vmem:[%s8 + $0x8] sm:$0xff]
    %v321 = vld [vmem:[%s8 + $0x10] sm:$0xff]
    %v322 = vld [vmem:[%s8 + $0x18] sm:$0xff]
    %v323 = vld [vmem:[%s9] sm:$0x1]
    %326 = vrot.lane.b32.xlu0 %v311, 96
    %v327 = vpop.permute.xlu0 %326
    %328 = vrot.lane.b32.xlu0 %v316, 96
    %v329 = vpop.permute.xlu0 %328
    %vm330 = vcmask 130048
    %v331 = vsel %vm330, %v311, 0
    %v333 = vsel %vm330, %v316, 0
    %v335 = vsel %vm330, %v327, 0
    %v337 = vsel %vm330, %v329, 0
    %339 = vmatprep.subr.mxu0 0.0
    %340 = vmatpush1.xpose.msra.mxu0 %v335
    %341 = vmatprep.subr.mxu0 0.0
    %342 = vmatpush1.xpose.msra.mxu0 %v337
    %343 = vmatprep.subr.mxu0 0.0
    %344 = vmatpush1.xpose.msra.mxu0 0.0
    %345 = vmatprep.subr.mxu0 0.0
    %346 = vmatpush1.xpose.msra.mxu0 0.0
    %347 = vmatprep.subr.mxu0 0.0
    %348 = vmatpush1.xpose.msra.mxu0 0.0
    %349 = vmatprep.subr.mxu0 0.0
    %350 = vmatpush1.xpose.msra.mxu0 0.0
    %351 = vmatprep.subr.mxu0 0.0
    %352 = vmatpush1.xpose.msra.mxu0 0.0
    %353 = vmatprep.subr.mxu0 0.0
    %354 = vmatpush1.xpose.msra.mxu0 0.0
    %355 = vmatprep.subr.mxu0 0.0
    %356 = vmatpush1.xpose.msra.mxu0 0.0
    %357 = vmatprep.subr.mxu0 0.0
    %358 = vmatpush1.xpose.msra.mxu0 0.0
    %359 = vmatprep.subr.mxu0 0.0
    %360 = vmatpush1.xpose.msra.mxu0 0.0
    %361 = vmatprep.subr.mxu0 0.0
    %362 = vmatpush1.xpose.msra.mxu0 0.0
    %363 = vmatprep.subr.mxu0 0.0
    %364 = vmatpush1.xpose.msra.mxu0 0.0
    %365 = vmatprep.subr.mxu0 0.0
    %366 = vmatpush1.xpose.msra.mxu0 0.0
    %367 = vmatprep.subr.mxu0 0.0
    %368 = vmatpush1.xpose.msra.mxu0 0.0
    %369 = vmatprep.subr.mxu0 0.0
    %370 = vmatpush1.xpose.msra.mxu0 0.0
    %371 = vmatprep.subr.mxu0 0.0
    %372 = vmatpush1.xpose.msra.mxu0 0.0
    %373 = vmatprep.subr.mxu0 0.0
    %374 = vmatpush1.xpose.msra.mxu0 0.0
    %375 = vmatprep.subr.mxu0 0.0
    %376 = vmatpush1.xpose.msra.mxu0 0.0
    %377 = vmatprep.subr.mxu0 0.0
    %378 = vmatpush1.xpose.msra.mxu0 0.0
    %379 = vmatprep.subr.mxu0 0.0
    %380 = vmatpush1.xpose.msra.mxu0 0.0
    %381 = vmatprep.subr.mxu0 0.0
    %382 = vmatpush1.xpose.msra.mxu0 0.0
    %383 = vmatprep.subr.mxu0 0.0
    %384 = vmatpush1.xpose.msra.mxu0 0.0
    %385 = vmatprep.subr.mxu0 0.0
    %386 = vmatpush1.xpose.msra.mxu0 0.0
    %387 = vmatprep.subr.mxu0 0.0
    %388 = vmatpush1.xpose.msra.mxu0 0.0
    %389 = vmatprep.subr.mxu0 0.0
    %390 = vmatpush1.xpose.msra.mxu0 0.0
    %391 = vmatprep.subr.mxu0 0.0
    %392 = vmatpush1.xpose.msra.mxu0 0.0
    %393 = vmatprep.subr.mxu0 0.0
    %394 = vmatpush1.xpose.msra.mxu0 0.0
    %395 = vmatprep.subr.mxu0 0.0
    %396 = vmatpush1.xpose.msra.mxu0 0.0
    %397 = vmatprep.subr.mxu0 0.0
    %398 = vmatpush1.xpose.msra.mxu0 0.0
    %399 = vmatprep.subr.mxu0 0.0
    %400 = vmatpush1.xpose.msra.mxu0 0.0
    %401 = vmatprep.subr.mxu0 0.0
    %402 = vmatpush1.xpose.msra.mxu0 0.0
    %403 = vmatprep.mubr.f32.mxu0 0.0
    %404 = vmatmul.mubr.f32.gmra.mrb[0].mxu0 %v331
    %v405 = vpop.f32.mrb[0].mxu0
    %v406 = vadd.f32 0.0, %v405
    %v407 = vpop.f32.mrb[0].mxu0
    %408 = vmatprep.mubr.f32.mxu0 0.0
    %409 = vmatmul.mubr.f32.gmra.mrb[0].mxu0 %v333
    %v410 = vpop.f32.mrb[0].mxu0
    %v411 = vadd.f32 0.0, %v410
    %v412 = vpop.f32.mrb[0].mxu0
    %413 = vdwg.mxu0
    %v414 = vmul.f32 %v406, 0.25
    %v415 = vmul.f32 %v411, 0.25
    %v416 = vadd.f32 %v414, %v66
    %v417 = vadd.f32 %v415, %v67
    %vm418 = vcmask 80896
    %v419 = vsel %vm418, %v416, -inf
    %420 = vmax.xlane.f32.xlu0 %v419
    %v421 = vpop.xlane.xlu0 %420
    %vm422 = vcmask 74752
    %v423 = vsel %vm422, %v417, -inf
    %424 = vmax.xlane.f32.xlu0 %v423
    %v425 = vpop.xlane.xlu0 %424
    %v426 = vsub.f32 %v416, %v421
    %v427 = vsub.f32 %v417, %v425
    %v428 = vmul.f32 %v426, 1.442695
    %v429 = vpow.pop %v428
    %v430 = vmul.f32 %v427, 1.442695
    %v431 = vpow.pop %v430
    %v432 = vsel %vm418, %v429, 0.0
    %433 = vadd.xlane.f32.xlu0 %v432
    %v434 = vpop.xlane.xlu0 %433
    %v435 = vsel %vm422, %v431, 0.0
    %436 = vadd.xlane.f32.xlu0 %v435
    %v437 = vpop.xlane.xlu0 %436
    %v438 = vrcp.pop %v434
    %v439 = vrcp.pop %v437
    %v440 = vmul.f32 %v429, %v438
    %v441 = vmul.f32 %v431, %v439
    %442 = vrot.lane.b32.xlu0 %v311, 64
    %v443 = vpop.permute.xlu0 %442
    %444 = vrot.lane.b32.xlu0 %v316, 64
    %v445 = vpop.permute.xlu0 %444
    %v448 = vsel %vm418, %v440, 0
    %v451 = vsel %vm418, %v441, 0
    %vm453 = vcmask 1041408
    %v454 = vsel %vm453, %v445, 0
    %456 = vmatprep.subr.mxu0 0.0
    %457 = vmatpush1.msra.mxu0 %v443
    %458 = vmatprep.subr.mxu0 0.0
    %459 = vmatpush1.msra.mxu0 %v454
    %460 = vmatprep.subr.mxu0 0.0
    %461 = vmatpush1.msra.mxu0 0.0
    %462 = vmatprep.subr.mxu0 0.0
    %463 = vmatpush1.msra.mxu0 0.0
    %464 = vmatprep.subr.mxu0 0.0
    %465 = vmatpush1.msra.mxu0 0.0
    %466 = vmatprep.subr.mxu0 0.0
    %467 = vmatpush1.msra.mxu0 0.0
    %468 = vmatprep.subr.mxu0 0.0
    %469 = vmatpush1.msra.mxu0 0.0
    %470 = vmatprep.subr.mxu0 0.0
    %471 = vmatpush1.msra.mxu0 0.0
    %472 = vmatprep.subr.mxu0 0.0
    %473 = vmatpush1.msra.mxu0 0.0
    %474 = vmatprep.subr.mxu0 0.0
    %475 = vmatpush1.msra.mxu0 0.0
    %476 = vmatprep.subr.mxu0 0.0
    %477 = vmatpush1.msra.mxu0 0.0
    %478 = vmatprep.subr.mxu0 0.0
    %479 = vmatpush1.msra.mxu0 0.0
    %480 = vmatprep.subr.mxu0 0.0
    %481 = vmatpush1.msra.mxu0 0.0
    %482 = vmatprep.subr.mxu0 0.0
    %483 = vmatpush1.msra.mxu0 0.0
    %484 = vmatprep.subr.mxu0 0.0
    %485 = vmatpush1.msra.mxu0 0.0
    %486 = vmatprep.subr.mxu0 0.0
    %487 = vmatpush1.msra.mxu0 0.0
    %488 = vmatprep.subr.mxu0 0.0
    %489 = vmatpush1.msra.mxu0 0.0
    %490 = vmatprep.subr.mxu0 0.0
    %491 = vmatpush1.msra.mxu0 0.0
    %492 = vmatprep.subr.mxu0 0.0
    %493 = vmatpush1.msra.mxu0 0.0
    %494 = vmatprep.subr.mxu0 0.0
    %495 = vmatpush1.msra.mxu0 0.0
    %496 = vmatprep.subr.mxu0 0.0
    %497 = vmatpush1.msra.mxu0 0.0
    %498 = vmatprep.subr.mxu0 0.0
    %499 = vmatpush1.msra.mxu0 0.0
    %500 = vmatprep.subr.mxu0 0.0
    %501 = vmatpush1.msra.mxu0 0.0
    %502 = vmatprep.subr.mxu0 0.0
    %503 = vmatpush1.msra.mxu0 0.0
    %504 = vmatprep.subr.mxu0 0.0
    %505 = vmatpush1.msra.mxu0 0.0
    %506 = vmatprep.subr.mxu0 0.0
    %507 = vmatpush1.msra.mxu0 0.0
    %508 = vmatprep.subr.mxu0 0.0
    %509 = vmatpush1.msra.mxu0 0.0
    %510 = vmatprep.subr.mxu0 0.0
    %511 = vmatpush1.msra.mxu0 0.0
    %512 = vmatprep.subr.mxu0 0.0
    %513 = vmatpush1.msra.mxu0 0.0
    %514 = vmatprep.subr.mxu0 0.0
    %515 = vmatpush1.msra.mxu0 0.0
    %516 = vmatprep.subr.mxu0 0.0
    %517 = vmatpush1.msra.mxu0 0.0
    %518 = vmatprep.subr.mxu0 0.0
    %519 = vmatpush1.msra.mxu0 0.0
    %520 = vmatprep.mubr.f32.mxu0 0.0
    %521 = vmatmul.mubr.f32.gmra.mrb[0].mxu0 %v448
    %v522 = vpop.f32.mrb[0].mxu0
    %v523 = vadd.f32 0.0, %v522
    %v524 = vpop.f32.mrb[0].mxu0
    %525 = vmatprep.mubr.f32.mxu0 0.0
    %526 = vmatmul.mubr.f32.gmra.mrb[0].mxu0 %v451
    %v527 = vpop.f32.mrb[0].mxu0
    %v528 = vadd.f32 0.0, %v527
    %v529 = vpop.f32.mrb[0].mxu0
    %530 = vdwg.mxu0
    %v532 = vsel %vm330, %v523, 0
    %v535 = vsel %vm330, %v528, 0
    %537 = vmatprep.subr.mxu0 0.0
    %538 = vmatpush1.msra.mxu0 %v319
    %539 = vmatprep.subr.mxu0 0.0
    %540 = vmatpush1.msra.mxu0 %v320
    %541 = vmatprep.subr.mxu0 0.0
    %542 = vmatpush1.msra.mxu0 0.0
    %543 = vmatprep.subr.mxu0 0.0
    %544 = vmatpush1.msra.mxu0 0.0
    %545 = vmatprep.subr.mxu0 0.0
    %546 = vmatpush1.msra.mxu0 0.0
    %547 = vmatprep.subr.mxu0 0.0
    %548 = vmatpush1.msra.mxu0 0.0
    %549 = vmatprep.subr.mxu0 0.0
    %550 = vmatpush1.msra.mxu0 0.0
    %551 = vmatprep.subr.mxu0 0.0
    %552 = vmatpush1.msra.mxu0 0.0
    %553 = vmatprep.subr.mxu0 0.0
    %554 = vmatpush1.msra.mxu0 0.0
    %555 = vmatprep.subr.mxu0 0.0
    %556 = vmatpush1.msra.mxu0 0.0
    %557 = vmatprep.subr.mxu0 0.0
    %558 = vmatpush1.msra.mxu0 0.0
    %559 = vmatprep.subr.mxu0 0.0
    %560 = vmatpush1.msra.mxu0 0.0
    %561 = vmatprep.subr.mxu0 0.0
    %562 = vmatpush1.msra.mxu0 0.0
    %563 = vmatprep.subr.mxu0 0.0
    %564 = vmatpush1.msra.mxu0 0.0
    %565 = vmatprep.subr.mxu0 0.0
    %566 = vmatpush1.msra.mxu0 0.0
    %567 = vmatprep.subr.mxu0 0.0
    %568 = vmatpush1.msra.mxu0 0.0
    %569 = vmatprep.subr.mxu0 0.0
    %570 = vmatpush1.msra.mxu0 0.0
    %571 = vmatprep.subr.mxu0 0.0
    %572 = vmatpush1.msra.mxu0 0.0
    %573 = vmatprep.subr.mxu0 0.0
    %574 = vmatpush1.msra.mxu0 0.0
    %575 = vmatprep.subr.mxu0 0.0
    %576 = vmatpush1.msra.mxu0 0.0
    %577 = vmatprep.subr.mxu0 0.0
    %578 = vmatpush1.msra.mxu0 0.0
    %579 = vmatprep.subr.mxu0 0.0
    %580 = vmatpush1.msra.mxu0 0.0
    %581 = vmatprep.subr.mxu0 0.0
    %582 = vmatpush1.msra.mxu0 0.0
    %583 = vmatprep.subr.mxu0 0.0
    %584 = vmatpush1.msra.mxu0 0.0
    %585 = vmatprep.subr.mxu0 0.0
    %586 = vmatpush1.msra.mxu0 0.0
    %587 = vmatprep.subr.mxu0 0.0
    %588 = vmatpush1.msra.mxu0 0.0
    %589 = vmatprep.subr.mxu0 0.0
    %590 = vmatpush1.msra.mxu0 0.0
    %591 = vmatprep.subr.mxu0 0.0
    %592 = vmatpush1.msra.mxu0 0.0
    %593 = vmatprep.subr.mxu0 0.0
    %594 = vmatpush1.msra.mxu0 0.0
    %595 = vmatprep.subr.mxu0 0.0
    %596 = vmatpush1.msra.mxu0 0.0
    %597 = vmatprep.subr.mxu0 0.0
    %598 = vmatpush1.msra.mxu0 0.0
    %599 = vmatprep.subr.mxu0 0.0
    %600 = vmatpush1.msra.mxu0 0.0
    %601 = vmatprep.mubr.f32.mxu0 0.0
    %602 = vmatmul.mubr.f32.gmra.mrb[0].mxu0 %v532
    %v603 = vpop.f32.mrb[0].mxu0
    %v604 = vadd.f32 0.0, %v603
    %v605 = vpop.f32.mrb[0].mxu0
    %606 = vmatprep.mubr.f32.mxu0 0.0
    %607 = vmatmul.mubr.f32.gmra.mrb[0].mxu0 %v535
    %v608 = vpop.f32.mrb[0].mxu0
    %v609 = vadd.f32 0.0, %v608
    %v610 = vpop.f32.mrb[0].mxu0
    %611 = vdwg.mxu0
    %v613 = vlaneseq
    %v614 = vshrl.u32 %v613, 7
    %v615 = vsub.s32 0, %v614
    %v616 = vrot.slane %v323, %v615
    %v618 = vadd.f32 %v616, %v604
    %v619 = vadd.f32 %v616, %v609
    %620 = vrot.lane.b32.xlu0 %v311, 112
    %v621 = vpop.permute.xlu0 %620
    %622 = vrot.lane.b32.xlu0 %v316, 112
    %v623 = vpop.permute.xlu0 %622
    %624 = vrot.lane.b32.xlu0 %v311, 80
    %v625 = vpop.permute.xlu0 %624
    %626 = vrot.lane.b32.xlu0 %v316, 80
    %v627 = vpop.permute.xlu0 %626
    %v628 = vsel %vm330, %v621, 0
    %v630 = vsel %vm330, %v623, 0
    %v632 = vsel %vm330, %v625, 0
    %v634 = vsel %vm330, %v627, 0
    %636 = vmatprep.subr.mxu0 0.0
    %637 = vmatpush1.xpose.msra.mxu0 %v632
    %638 = vmatprep.subr.mxu0 0.0
    %639 = vmatpush1.xpose.msra.mxu0 %v634
    %640 = vmatprep.subr.mxu0 0.0
    %641 = vmatpush1.xpose.msra.mxu0 0.0
    %642 = vmatprep.subr.mxu0 0.0
    %643 = vmatpush1.xpose.msra.mxu0 0.0
    %644 = vmatprep.subr.mxu0 0.0
    %645 = vmatpush1.xpose.msra.mxu0 0.0
    %646 = vmatprep.subr.mxu0 0.0
    %647 = vmatpush1.xpose.msra.mxu0 0.0
    %648 = vmatprep.subr.mxu0 0.0
    %649 = vmatpush1.xpose.msra.mxu0 0.0
    %650 = vmatprep.subr.mxu0 0.0
    %651 = vmatpush1.xpose.msra.mxu0 0.0
    %652 = vmatprep.subr.mxu0 0.0
    %653 = vmatpush1.xpose.msra.mxu0 0.0
    %654 = vmatprep.subr.mxu0 0.0
    %655 = vmatpush1.xpose.msra.mxu0 0.0
    %656 = vmatprep.subr.mxu0 0.0
    %657 = vmatpush1.xpose.msra.mxu0 0.0
    %658 = vmatprep.subr.mxu0 0.0
    %659 = vmatpush1.xpose.msra.mxu0 0.0
    %660 = vmatprep.subr.mxu0 0.0
    %661 = vmatpush1.xpose.msra.mxu0 0.0
    %662 = vmatprep.subr.mxu0 0.0
    %663 = vmatpush1.xpose.msra.mxu0 0.0
    %664 = vmatprep.subr.mxu0 0.0
    %665 = vmatpush1.xpose.msra.mxu0 0.0
    %666 = vmatprep.subr.mxu0 0.0
    %667 = vmatpush1.xpose.msra.mxu0 0.0
    %668 = vmatprep.subr.mxu0 0.0
    %669 = vmatpush1.xpose.msra.mxu0 0.0
    %670 = vmatprep.subr.mxu0 0.0
    %671 = vmatpush1.xpose.msra.mxu0 0.0
    %672 = vmatprep.subr.mxu0 0.0
    %673 = vmatpush1.xpose.msra.mxu0 0.0
    %674 = vmatprep.subr.mxu0 0.0
    %675 = vmatpush1.xpose.msra.mxu0 0.0
    %676 = vmatprep.subr.mxu0 0.0
    %677 = vmatpush1.xpose.msra.mxu0 0.0
    %678 = vmatprep.subr.mxu0 0.0
    %679 = vmatpush1.xpose.msra.mxu0 0.0
    %680 = vmatprep.subr.mxu0 0.0
    %681 = vmatpush1.xpose.msra.mxu0 0.0
    %682 = vmatprep.subr.mxu0 0.0
    %683 = vmatpush1.xpose.msra.mxu0 0.0
    %684 = vmatprep.subr.mxu0 0.0
    %685 = vmatpush1.xpose.msra.mxu0 0.0
    %686 = vmatprep.subr.mxu0 0.0
    %687 = vmatpush1.xpose.msra.mxu0 0.0
    %688 = vmatprep.subr.mxu0 0.0
    %689 = vmatpush1.xpose.msra.mxu0 0.0
    %690 = vmatprep.subr.mxu0 0.0
    %691 = vmatpush1.xpose.msra.mxu0 0.0
    %692 = vmatprep.subr.mxu0 0.0
    %693 = vmatpush1.xpose.msra.mxu0 0.0
    %694 = vmatprep.subr.mxu0 0.0
    %695 = vmatpush1.xpose.msra.mxu0 0.0
    %696 = vmatprep.subr.mxu0 0.0
    %697 = vmatpush1.xpose.msra.mxu0 0.0
    %698 = vmatprep.subr.mxu0 0.0
    %699 = vmatpush1.xpose.msra.mxu0 0.0
    %700 = vmatprep.mubr.f32.mxu0 0.0
    %701 = vmatmul.mubr.f32.gmra.mrb[0].mxu0 %v628
    %v702 = vpop.f32.mrb[0].mxu0
    %v703 = vadd.f32 0.0, %v702
    %v704 = vpop.f32.mrb[0].mxu0
    %705 = vmatprep.mubr.f32.mxu0 0.0
    %706 = vmatmul.mubr.f32.gmra.mrb[0].mxu0 %v630
    %v707 = vpop.f32.mrb[0].mxu0
    %v708 = vadd.f32 0.0, %v707
    %v709 = vpop.f32.mrb[0].mxu0
    %710 = vdwg.mxu0
    %v711 = vmul.f32 %v703, 0.25
    %v712 = vmul.f32 %v708, 0.25
    %v713 = vadd.f32 %v711, %v66
    %v714 = vadd.f32 %v712, %v67
    %v715 = vsel %vm418, %v713, -inf
    %716 = vmax.xlane.f32.xlu0 %v715
    %v717 = vpop.xlane.xlu0 %716
    %v718 = vsel %vm422, %v714, -inf
    %719 = vmax.xlane.f32.xlu0 %v718
    %v720 = vpop.xlane.xlu0 %719
    %v721 = vsub.f32 %v713, %v717
    %v722 = vsub.f32 %v714, %v720
    %v723 = vmul.f32 %v721, 1.442695
    %v724 = vpow.pop %v723
    %v725 = vmul.f32 %v722, 1.442695
    %v726 = vpow.pop %v725
    %v727 = vsel %vm418, %v724, 0.0
    %728 = vadd.xlane.f32.xlu0 %v727
    %v729 = vpop.xlane.xlu0 %728
    %v730 = vsel %vm422, %v726, 0.0
    %731 = vadd.xlane.f32.xlu0 %v730
    %v732 = vpop.xlane.xlu0 %731
    %v733 = vrcp.pop %v729
    %v734 = vrcp.pop %v732
    %v735 = vmul.f32 %v724, %v733
    %v736 = vmul.f32 %v726, %v734
    %737 = vrot.lane.b32.xlu0 %v311, 48
    %v738 = vpop.permute.xlu0 %737
    %739 = vrot.lane.b32.xlu0 %v316, 48
    %v740 = vpop.permute.xlu0 %739
    %v743 = vsel %vm418, %v735, 0
    %v746 = vsel %vm418, %v736, 0
    %v748 = vsel %vm453, %v740, 0
    %750 = vmatprep.subr.mxu0 0.0
    %751 = vmatpush1.msra.mxu0 %v738
    %752 = vmatprep.subr.mxu0 0.0
    %753 = vmatpush1.msra.mxu0 %v748
    %754 = vmatprep.subr.mxu0 0.0
    %755 = vmatpush1.msra.mxu0 0.0
    %756 = vmatprep.subr.mxu0 0.0
    %757 = vmatpush1.msra.mxu0 0.0
    %758 = vmatprep.subr.mxu0 0.0
    %759 = vmatpush1.msra.mxu0 0.0
    %760 = vmatprep.subr.mxu0 0.0
    %761 = vmatpush1.msra.mxu0 0.0
    %762 = vmatprep.subr.mxu0 0.0
    %763 = vmatpush1.msra.mxu0 0.0
    %764 = vmatprep.subr.mxu0 0.0
    %765 = vmatpush1.msra.mxu0 0.0
    %766 = vmatprep.subr.mxu0 0.0
    %767 = vmatpush1.msra.mxu0 0.0
    %768 = vmatprep.subr.mxu0 0.0
    %769 = vmatpush1.msra.mxu0 0.0
    %770 = vmatprep.subr.mxu0 0.0
    %771 = vmatpush1.msra.mxu0 0.0
    %772 = vmatprep.subr.mxu0 0.0
    %773 = vmatpush1.msra.mxu0 0.0
    %774 = vmatprep.subr.mxu0 0.0
    %775 = vmatpush1.msra.mxu0 0.0
    %776 = vmatprep.subr.mxu0 0.0
    %777 = vmatpush1.msra.mxu0 0.0
    %778 = vmatprep.subr.mxu0 0.0
    %779 = vmatpush1.msra.mxu0 0.0
    %780 = vmatprep.subr.mxu0 0.0
    %781 = vmatpush1.msra.mxu0 0.0
    %782 = vmatprep.subr.mxu0 0.0
    %783 = vmatpush1.msra.mxu0 0.0
    %784 = vmatprep.subr.mxu0 0.0
    %785 = vmatpush1.msra.mxu0 0.0
    %786 = vmatprep.subr.mxu0 0.0
    %787 = vmatpush1.msra.mxu0 0.0
    %788 = vmatprep.subr.mxu0 0.0
    %789 = vmatpush1.msra.mxu0 0.0
    %790 = vmatprep.subr.mxu0 0.0
    %791 = vmatpush1.msra.mxu0 0.0
    %792 = vmatprep.subr.mxu0 0.0
    %793 = vmatpush1.msra.mxu0 0.0
    %794 = vmatprep.subr.mxu0 0.0
    %795 = vmatpush1.msra.mxu0 0.0
    %796 = vmatprep.subr.mxu0 0.0
    %797 = vmatpush1.msra.mxu0 0.0
    %798 = vmatprep.subr.mxu0 0.0
    %799 = vmatpush1.msra.mxu0 0.0
    %800 = vmatprep.subr.mxu0 0.0
    %801 = vmatpush1.msra.mxu0 0.0
    %802 = vmatprep.subr.mxu0 0.0
    %803 = vmatpush1.msra.mxu0 0.0
    %804 = vmatprep.subr.mxu0 0.0
    %805 = vmatpush1.msra.mxu0 0.0
    %806 = vmatprep.subr.mxu0 0.0
    %807 = vmatpush1.msra.mxu0 0.0
    %808 = vmatprep.subr.mxu0 0.0
    %809 = vmatpush1.msra.mxu0 0.0
    %810 = vmatprep.subr.mxu0 0.0
    %811 = vmatpush1.msra.mxu0 0.0
    %812 = vmatprep.subr.mxu0 0.0
    %813 = vmatpush1.msra.mxu0 0.0
    %814 = vmatprep.mubr.f32.mxu0 0.0
    %815 = vmatmul.mubr.f32.gmra.mrb[0].mxu0 %v743
    %v816 = vpop.f32.mrb[0].mxu0
    %v817 = vadd.f32 0.0, %v816
    %v818 = vpop.f32.mrb[0].mxu0
    %819 = vmatprep.mubr.f32.mxu0 0.0
    %820 = vmatmul.mubr.f32.gmra.mrb[0].mxu0 %v746
    %v821 = vpop.f32.mrb[0].mxu0
    %v822 = vadd.f32 0.0, %v821
    %v823 = vpop.f32.mrb[0].mxu0
    %824 = vdwg.mxu0
    %v826 = vsel %vm330, %v817, 0
    %v829 = vsel %vm330, %v822, 0
    %831 = vmatprep.subr.mxu0 0.0
    %832 = vmatpush1.msra.mxu0 %v321
    %833 = vmatprep.subr.mxu0 0.0
    %834 = vmatpush1.msra.mxu0 %v322
    %835 = vmatprep.subr.mxu0 0.0
    %836 = vmatpush1.msra.mxu0 0.0
    %837 = vmatprep.subr.mxu0 0.0
    %838 = vmatpush1.msra.mxu0 0.0
    %839 = vmatprep.subr.mxu0 0.0
    %840 = vmatpush1.msra.mxu0 0.0
    %841 = vmatprep.subr.mxu0 0.0
    %842 = vmatpush1.msra.mxu0 0.0
    %843 = vmatprep.subr.mxu0 0.0
    %844 = vmatpush1.msra.mxu0 0.0
    %845 = vmatprep.subr.mxu0 0.0
    %846 = vmatpush1.msra.mxu0 0.0
    %847 = vmatprep.subr.mxu0 0.0
    %848 = vmatpush1.msra.mxu0 0.0
    %849 = vmatprep.subr.mxu0 0.0
    %850 = vmatpush1.msra.mxu0 0.0
    %851 = vmatprep.subr.mxu0 0.0
    %852 = vmatpush1.msra.mxu0 0.0
    %853 = vmatprep.subr.mxu0 0.0
    %854 = vmatpush1.msra.mxu0 0.0
    %855 = vmatprep.subr.mxu0 0.0
    %856 = vmatpush1.msra.mxu0 0.0
    %857 = vmatprep.subr.mxu0 0.0
    %858 = vmatpush1.msra.mxu0 0.0
    %859 = vmatprep.subr.mxu0 0.0
    %860 = vmatpush1.msra.mxu0 0.0
    %861 = vmatprep.subr.mxu0 0.0
    %862 = vmatpush1.msra.mxu0 0.0
    %863 = vmatprep.subr.mxu0 0.0
    %864 = vmatpush1.msra.mxu0 0.0
    %865 = vmatprep.subr.mxu0 0.0
    %866 = vmatpush1.msra.mxu0 0.0
    %867 = vmatprep.subr.mxu0 0.0
    %868 = vmatpush1.msra.mxu0 0.0
    %869 = vmatprep.subr.mxu0 0.0
    %870 = vmatpush1.msra.mxu0 0.0
    %871 = vmatprep.subr.mxu0 0.0
    %872 = vmatpush1.msra.mxu0 0.0
    %873 = vmatprep.subr.mxu0 0.0
    %874 = vmatpush1.msra.mxu0 0.0
    %875 = vmatprep.subr.mxu0 0.0
    %876 = vmatpush1.msra.mxu0 0.0
    %877 = vmatprep.subr.mxu0 0.0
    %878 = vmatpush1.msra.mxu0 0.0
    %879 = vmatprep.subr.mxu0 0.0
    %880 = vmatpush1.msra.mxu0 0.0
    %881 = vmatprep.subr.mxu0 0.0
    %882 = vmatpush1.msra.mxu0 0.0
    %883 = vmatprep.subr.mxu0 0.0
    %884 = vmatpush1.msra.mxu0 0.0
    %885 = vmatprep.subr.mxu0 0.0
    %886 = vmatpush1.msra.mxu0 0.0
    %887 = vmatprep.subr.mxu0 0.0
    %888 = vmatpush1.msra.mxu0 0.0
    %889 = vmatprep.subr.mxu0 0.0
    %890 = vmatpush1.msra.mxu0 0.0
    %891 = vmatprep.subr.mxu0 0.0
    %892 = vmatpush1.msra.mxu0 0.0
    %893 = vmatprep.subr.mxu0 0.0
    %894 = vmatpush1.msra.mxu0 0.0
    %895 = vmatprep.mubr.f32.mxu0 0.0
    %896 = vmatmul.mubr.f32.gmra.mrb[0].mxu0 %v826
    %v897 = vpop.f32.mrb[0].mxu0
    %v898 = vadd.f32 0.0, %v897
    %v899 = vpop.f32.mrb[0].mxu0
    %900 = vmatprep.mubr.f32.mxu0 0.0
    %901 = vmatmul.mubr.f32.gmra.mrb[0].mxu0 %v829
    %v902 = vpop.f32.mrb[0].mxu0
    %v903 = vadd.f32 0.0, %v902
    %v904 = vpop.f32.mrb[0].mxu0
    %905 = vdwg.mxu0
    %v906 = vadd.f32 %v618, %v898
    %v907 = vadd.f32 %v619, %v903
    %v908 = vadd.f32 %v172, %v906
    %v909 = vadd.f32 %v177, %v907
    %v910 = vld [vmem:[%s10] sm:$0x1]
    %v911 = vld [vmem:[%s11] sm:$0x1]
    %v912 = vsel %vm182, %v908, 0.0
    %913 = vadd.xlane.f32.xlu0 %v912
    %v914 = vpop.xlane.xlu0 %913
    %v915 = vsel %vm186, %v909, 0.0
    %916 = vadd.xlane.f32.xlu0 %v915
    %v917 = vpop.xlane.xlu0 %916
    %v918 = vmul.f32 %v914, %v190
    %v919 = vmul.f32 %v917, %v190
    %v920 = vsub.f32 %v908, %v918
    %v921 = vsub.f32 %v909, %v919
    %v922 = vmul.f32 %v920, %v920
    %v923 = vmul.f32 %v921, %v921
    %v924 = vsel %vm182, %v922, 0.0
    %925 = vadd.xlane.f32.xlu0 %v924
    %v926 = vpop.xlane.xlu0 %925
    %v927 = vsel %vm186, %v923, 0.0
    %928 = vadd.xlane.f32.xlu0 %v927
    %v929 = vpop.xlane.xlu0 %928
    %v930 = vmul.f32 %v926, %v190
    %v931 = vmul.f32 %v929, %v190
    %v932 = vadd.f32 %v930, 1e-12
    %v933 = vadd.f32 %v931, 1e-12
    %v934 = vrsqrt.pop %v932
    %v935 = vrsqrt.pop %v933
    %v936 = vmul.f32 %v920, %v934
    %v937 = vmul.f32 %v921, %v935
    %v939 = vlaneseq
    %v940 = vshrl.u32 %v939, 7
    %v941 = vsub.s32 0, %v940
    %v942 = vrot.slane %v910, %v941
    %v944 = vmul.f32 %v936, %v942
    %v945 = vmul.f32 %v937, %v942
    %v947 = vlaneseq
    %v948 = vshrl.u32 %v947, 7
    %v949 = vsub.s32 0, %v948
    %v950 = vrot.slane %v911, %v949
    %v952 = vadd.f32 %v944, %v950
    %v953 = vadd.f32 %v945, %v950
    %v954 = vld [vmem:[%s12] sm:$0xff]
    %v955 = vld [vmem:[%s12 + $0x8] sm:$0xff]
    %v956 = vld [vmem:[%s12 + $0x10] sm:$0xff]
    %v957 = vld [vmem:[%s12 + $0x18] sm:$0xff]
    %v958 = vld [vmem:[%s13] sm:$0x1]
    %v960 = vlaneseq
    %v961 = vshrl.u32 %v960, 7
    %v962 = vsub.s32 0, %v961
    %v963 = vrot.slane %v958, %v962
    %v966 = vsel %vm182, %v952, 0
    %v969 = vsel %vm182, %v953, 0
    %971 = vmatprep.subr.mxu0 0.0
    %972 = vmatpush1.msra.mxu0 %v954
    %973 = vmatprep.subr.mxu0 0.0
    %974 = vmatpush1.msra.mxu0 %v955
    %975 = vmatprep.subr.mxu0 0.0
    %976 = vmatpush1.msra.mxu0 %v956
    %977 = vmatprep.subr.mxu0 0.0
    %978 = vmatpush1.msra.mxu0 %v957
    %979 = vmatprep.subr.mxu0 0.0
    %980 = vmatpush1.msra.mxu0 0.0
    %981 = vmatprep.subr.mxu0 0.0
    %982 = vmatpush1.msra.mxu0 0.0
    %983 = vmatprep.subr.mxu0 0.0
    %984 = vmatpush1.msra.mxu0 0.0
    %985 = vmatprep.subr.mxu0 0.0
    %986 = vmatpush1.msra.mxu0 0.0
    %987 = vmatprep.subr.mxu0 0.0
    %988 = vmatpush1.msra.mxu0 0.0
    %989 = vmatprep.subr.mxu0 0.0
    %990 = vmatpush1.msra.mxu0 0.0
    %991 = vmatprep.subr.mxu0 0.0
    %992 = vmatpush1.msra.mxu0 0.0
    %993 = vmatprep.subr.mxu0 0.0
    %994 = vmatpush1.msra.mxu0 0.0
    %995 = vmatprep.subr.mxu0 0.0
    %996 = vmatpush1.msra.mxu0 0.0
    %997 = vmatprep.subr.mxu0 0.0
    %998 = vmatpush1.msra.mxu0 0.0
    %999 = vmatprep.subr.mxu0 0.0
    %1000 = vmatpush1.msra.mxu0 0.0
    %1001 = vmatprep.subr.mxu0 0.0
    %1002 = vmatpush1.msra.mxu0 0.0
    %1003 = vmatprep.subr.mxu0 0.0
    %1004 = vmatpush1.msra.mxu0 0.0
    %1005 = vmatprep.subr.mxu0 0.0
    %1006 = vmatpush1.msra.mxu0 0.0
    %1007 = vmatprep.subr.mxu0 0.0
    %1008 = vmatpush1.msra.mxu0 0.0
    %1009 = vmatprep.subr.mxu0 0.0
    %1010 = vmatpush1.msra.mxu0 0.0
    %1011 = vmatprep.subr.mxu0 0.0
    %1012 = vmatpush1.msra.mxu0 0.0
    %1013 = vmatprep.subr.mxu0 0.0
    %1014 = vmatpush1.msra.mxu0 0.0
    %1015 = vmatprep.subr.mxu0 0.0
    %1016 = vmatpush1.msra.mxu0 0.0
    %1017 = vmatprep.subr.mxu0 0.0
    %1018 = vmatpush1.msra.mxu0 0.0
    %1019 = vmatprep.subr.mxu0 0.0
    %1020 = vmatpush1.msra.mxu0 0.0
    %1021 = vmatprep.subr.mxu0 0.0
    %1022 = vmatpush1.msra.mxu0 0.0
    %1023 = vmatprep.subr.mxu0 0.0
    %1024 = vmatpush1.msra.mxu0 0.0
    %1025 = vmatprep.subr.mxu0 0.0
    %1026 = vmatpush1.msra.mxu0 0.0
    %1027 = vmatprep.subr.mxu0 0.0
    %1028 = vmatpush1.msra.mxu0 0.0
    %1029 = vmatprep.subr.mxu0 0.0
    %1030 = vmatpush1.msra.mxu0 0.0
    %1031 = vmatprep.subr.mxu0 0.0
    %1032 = vmatpush1.msra.mxu0 0.0
    %1033 = vmatprep.subr.mxu0 0.0
    %1034 = vmatpush1.msra.mxu0 0.0
    %1035 = vmatprep.mubr.f32.mxu0 0.0
    %1036 = vmatmul.mubr.f32.gmra.mrb[0].mxu0 %v966
    %v1037 = vpop.f32.mrb[0].mxu0
    %v1038 = vadd.f32 %v963, %v1037
    %v1039 = vpop.f32.mrb[0].mxu0
    %1040 = vmatprep.mubr.f32.mxu0 0.0
    %1041 = vmatmul.mubr.f32.gmra.mrb[0].mxu0 %v969
    %v1042 = vpop.f32.mrb[0].mxu0
    %v1043 = vadd.f32 %v963, %v1042
    %v1044 = vpop.f32.mrb[0].mxu0
    %1045 = vdwg.mxu0
    %v1046 = vmul.f32 %v1038, 0.5
    %v1047 = vmul.f32 %v1043, 0.5
    %v1048 = vmul.f32 %v1038, 0.044715
    %v1049 = vmul.f32 %v1043, 0.044715
    %v1050 = vmul.f32 %v1048, %v1038
    %v1051 = vmul.f32 %v1049, %v1043
    %v1052 = vmul.f32 %v1050, %v1038
    %v1053 = vmul.f32 %v1051, %v1043
    %v1054 = vadd.f32 %v1038, %v1052
    %v1055 = vadd.f32 %v1043, %v1053
    %v1056 = vmul.f32 %v1054, 0.7978846
    %v1057 = vmul.f32 %v1055, 0.7978846
    %v1058 = vtanh.pop %v1056
    %v1059 = vtanh.pop %v1057
    %v1060 = vadd.f32 %v1058, 1.0
    %v1061 = vadd.f32 %v1059, 1.0
    %v1062 = vmul.f32 %v1046, %v1060
    %v1063 = vmul.f32 %v1047, %v1061
    %v1064 = vld [vmem:[%s14] sm:$0xff]
    %v1065 = vld [vmem:[%s14 + $0x8] sm:$0xff]
    %v1066 = vld [vmem:[%s14 + $0x10] sm:$0xff]
    %v1067 = vld [vmem:[%s14 + $0x18] sm:$0xff]
    %v1068 = vld [vmem:[%s14 + $0x20] sm:$0xff]
    %v1069 = vld [vmem:[%s14 + $0x28] sm:$0xff]
    %v1070 = vld [vmem:[%s14 + $0x30] sm:$0xff]
    %v1071 = vld [vmem:[%s14 + $0x38] sm:$0xff]
    %v1073 = vsel %vm98, %v1062, 0
    %v1076 = vsel %vm98, %v1063, 0
    %1078 = vmatprep.subr.mxu0 0.0
    %1079 = vmatpush1.msra.mxu0 %v1064
    %1080 = vmatprep.subr.mxu0 0.0
    %1081 = vmatpush1.msra.mxu0 %v1065
    %1082 = vmatprep.subr.mxu0 0.0
    %1083 = vmatpush1.msra.mxu0 %v1066
    %1084 = vmatprep.subr.mxu0 0.0
    %1085 = vmatpush1.msra.mxu0 %v1067
    %1086 = vmatprep.subr.mxu0 0.0
    %1087 = vmatpush1.msra.mxu0 %v1068
    %1088 = vmatprep.subr.mxu0 0.0
    %1089 = vmatpush1.msra.mxu0 %v1069
    %1090 = vmatprep.subr.mxu0 0.0
    %1091 = vmatpush1.msra.mxu0 %v1070
    %1092 = vmatprep.subr.mxu0 0.0
    %1093 = vmatpush1.msra.mxu0 %v1071
    %1094 = vmatprep.subr.mxu0 0.0
    %1095 = vmatpush1.msra.mxu0 0.0
    %1096 = vmatprep.subr.mxu0 0.0
    %1097 = vmatpush1.msra.mxu0 0.0
    %1098 = vmatprep.subr.mxu0 0.0
    %1099 = vmatpush1.msra.mxu0 0.0
    %1100 = vmatprep.subr.mxu0 0.0
    %1101 = vmatpush1.msra.mxu0 0.0
    %1102 = vmatprep.subr.mxu0 0.0
    %1103 = vmatpush1.msra.mxu0 0.0
    %1104 = vmatprep.subr.mxu0 0.0
    %1105 = vmatpush1.msra.mxu0 0.0
    %1106 = vmatprep.subr.mxu0 0.0
    %1107 = vmatpush1.msra.mxu0 0.0
    %1108 = vmatprep.subr.mxu0 0.0
    %1109 = vmatpush1.msra.mxu0 0.0
    %1110 = vmatprep.subr.mxu0 0.0
    %1111 = vmatpush1.msra.mxu0 0.0
    %1112 = vmatprep.subr.mxu0 0.0
    %1113 = vmatpush1.msra.mxu0 0.0
    %1114 = vmatprep.subr.mxu0 0.0
    %1115 = vmatpush1.msra.mxu0 0.0
    %1116 = vmatprep.subr.mxu0 0.0
    %1117 = vmatpush1.msra.mxu0 0.0
    %1118 = vmatprep.subr.mxu0 0.0
    %1119 = vmatpush1.msra.mxu0 0.0
    %1120 = vmatprep.subr.mxu0 0.0
    %1121 = vmatpush1.msra.mxu0 0.0
    %1122 = vmatprep.subr.mxu0 0.0
    %1123 = vmatpush1.msra.mxu0 0.0
    %1124 = vmatprep.subr.mxu0 0.0
    %1125 = vmatpush1.msra.mxu0 0.0
    %1126 = vmatprep.subr.mxu0 0.0
    %1127 = vmatpush1.msra.mxu0 0.0
    %1128 = vmatprep.subr.mxu0 0.0
    %1129 = vmatpush1.msra.mxu0 0.0
    %1130 = vmatprep.subr.mxu0 0.0
    %1131 = vmatpush1.msra.mxu0 0.0
    %1132 = vmatprep.subr.mxu0 0.0
    %1133 = vmatpush1.msra.mxu0 0.0
    %1134 = vmatprep.subr.mxu0 0.0
    %1135 = vmatpush1.msra.mxu0 0.0
    %1136 = vmatprep.subr.mxu0 0.0
    %1137 = vmatpush1.msra.mxu0 0.0
    %1138 = vmatprep.subr.mxu0 0.0
    %1139 = vmatpush1.msra.mxu0 0.0
    %1140 = vmatprep.subr.mxu0 0.0
    %1141 = vmatpush1.msra.mxu0 0.0
    %1142 = vmatprep.mubr.f32.mxu0 0.0
    %1143 = vmatmul.mubr.f32.gmra.mrb[0].mxu0 %v1073
    %v1144 = vpop.f32.mrb[0].mxu0
    %v1145 = vadd.f32 0.0, %v1144
    %v1146 = vpop.f32.mrb[0].mxu0
    %1147 = vmatprep.mubr.f32.mxu0 0.0
    %1148 = vmatmul.mubr.f32.gmra.mrb[0].mxu0 %v1076
    %v1149 = vpop.f32.mrb[0].mxu0
    %v1150 = vadd.f32 0.0, %v1149
    %v1151 = vpop.f32.mrb[0].mxu0
    %1152 = vdwg.mxu0
    %v1153 = vadd.f32 %v908, %v1145
    %v1154 = vadd.f32 %v909, %v1150
    %v1155 = vld [vmem:[%s15] sm:$0x1]
    %v1157 = vlaneseq
    %v1158 = vshrl.u32 %v1157, 7
    %v1159 = vsub.s32 0, %v1158
    %v1160 = vrot.slane %v1155, %v1159
    %v1162 = vadd.f32 %v1153, %v1160
    %v1163 = vadd.f32 %v1154, %v1160
    %s1164 = scalar_lea.vmem %s4, 1
    %v1165 = vld [vmem:[%s1164] sm:$0x1]
    %s1166 = scalar_lea.vmem %s5, 1
    %v1167 = vld [vmem:[%s1166] sm:$0x1]
    %v1168 = vsel %vm182, %v1162, 0.0
    %1169 = vadd.xlane.f32.xlu0 %v1168
    %v1170 = vpop.xlane.xlu0 %1169
    %v1171 = vsel %vm186, %v1163, 0.0
    %1172 = vadd.xlane.f32.xlu0 %v1171
    %v1173 = vpop.xlane.xlu0 %1172
    %v1174 = vmul.f32 %v1170, %v190
    %v1175 = vmul.f32 %v1173, %v190
    %v1176 = vsub.f32 %v1162, %v1174
    %v1177 = vsub.f32 %v1163, %v1175
    %v1178 = vmul.f32 %v1176, %v1176
    %v1179 = vmul.f32 %v1177, %v1177
    %v1180 = vsel %vm182, %v1178, 0.0
    %1181 = vadd.xlane.f32.xlu0 %v1180
    %v1182 = vpop.xlane.xlu0 %1181
    %v1183 = vsel %vm186, %v1179, 0.0
    %1184 = vadd.xlane.f32.xlu0 %v1183
    %v1185 = vpop.xlane.xlu0 %1184
    %v1186 = vmul.f32 %v1182, %v190
    %v1187 = vmul.f32 %v1185, %v190
    %v1188 = vadd.f32 %v1186, 1e-12
    %v1189 = vadd.f32 %v1187, 1e-12
    %v1190 = vrsqrt.pop %v1188
    %v1191 = vrsqrt.pop %v1189
    %v1192 = vmul.f32 %v1176, %v1190
    %v1193 = vmul.f32 %v1177, %v1191
    %v1195 = vlaneseq
    %v1196 = vshrl.u32 %v1195, 7
    %v1197 = vsub.s32 0, %v1196
    %v1198 = vrot.slane %v1165, %v1197
    %v1200 = vmul.f32 %v1192, %v1198
    %v1201 = vmul.f32 %v1193, %v1198
    %v1203 = vlaneseq
    %v1204 = vshrl.u32 %v1203, 7
    %v1205 = vsub.s32 0, %v1204
    %v1206 = vrot.slane %v1167, %v1205
    %v1208 = vadd.f32 %v1200, %v1206
    %v1209 = vadd.f32 %v1201, %v1206
    %s1210 = scalar_lea.vmem %s6, 32
    %v1211 = vld [vmem:[%s1210] sm:$0xff]
    %v1212 = vld [vmem:[%s1210 + $0x8] sm:$0xff]
    %v1213 = vld [vmem:[%s1210 + $0x10] sm:$0xff]
    %v1214 = vld [vmem:[%s1210 + $0x18] sm:$0xff]
    %s1215 = scalar_lea.vmem %s7, 1
    %v1216 = vld [vmem:[%s1215] sm:$0x1]
    %v1218 = vlaneseq
    %v1219 = vshrl.u32 %v1218, 7
    %v1220 = vsub.s32 0, %v1219
    %v1221 = vrot.slane %v1216, %v1220
    %v1224 = vsel %vm182, %v1208, 0
    %v1227 = vsel %vm182, %v1209, 0
    %1229 = vmatprep.subr.mxu0 0.0
    %1230 = vmatpush1.msra.mxu0 %v1211
    %1231 = vmatprep.subr.mxu0 0.0
    %1232 = vmatpush1.msra.mxu0 %v1212
    %1233 = vmatprep.subr.mxu0 0.0
    %1234 = vmatpush1.msra.mxu0 %v1213
    %1235 = vmatprep.subr.mxu0 0.0
    %1236 = vmatpush1.msra.mxu0 %v1214
    %1237 = vmatprep.subr.mxu0 0.0
    %1238 = vmatpush1.msra.mxu0 0.0
    %1239 = vmatprep.subr.mxu0 0.0
    %1240 = vmatpush1.msra.mxu0 0.0
    %1241 = vmatprep.subr.mxu0 0.0
    %1242 = vmatpush1.msra.mxu0 0.0
    %1243 = vmatprep.subr.mxu0 0.0
    %1244 = vmatpush1.msra.mxu0 0.0
    %1245 = vmatprep.subr.mxu0 0.0
    %1246 = vmatpush1.msra.mxu0 0.0
    %1247 = vmatprep.subr.mxu0 0.0
    %1248 = vmatpush1.msra.mxu0 0.0
    %1249 = vmatprep.subr.mxu0 0.0
    %1250 = vmatpush1.msra.mxu0 0.0
    %1251 = vmatprep.subr.mxu0 0.0
    %1252 = vmatpush1.msra.mxu0 0.0
    %1253 = vmatprep.subr.mxu0 0.0
    %1254 = vmatpush1.msra.mxu0 0.0
    %1255 = vmatprep.subr.mxu0 0.0
    %1256 = vmatpush1.msra.mxu0 0.0
    %1257 = vmatprep.subr.mxu0 0.0
    %1258 = vmatpush1.msra.mxu0 0.0
    %1259 = vmatprep.subr.mxu0 0.0
    %1260 = vmatpush1.msra.mxu0 0.0
    %1261 = vmatprep.subr.mxu0 0.0
    %1262 = vmatpush1.msra.mxu0 0.0
    %1263 = vmatprep.subr.mxu0 0.0
    %1264 = vmatpush1.msra.mxu0 0.0
    %1265 = vmatprep.subr.mxu0 0.0
    %1266 = vmatpush1.msra.mxu0 0.0
    %1267 = vmatprep.subr.mxu0 0.0
    %1268 = vmatpush1.msra.mxu0 0.0
    %1269 = vmatprep.subr.mxu0 0.0
    %1270 = vmatpush1.msra.mxu0 0.0
    %1271 = vmatprep.subr.mxu0 0.0
    %1272 = vmatpush1.msra.mxu0 0.0
    %1273 = vmatprep.subr.mxu0 0.0
    %1274 = vmatpush1.msra.mxu0 0.0
    %1275 = vmatprep.subr.mxu0 0.0
    %1276 = vmatpush1.msra.mxu0 0.0
    %1277 = vmatprep.subr.mxu0 0.0
    %1278 = vmatpush1.msra.mxu0 0.0
    %1279 = vmatprep.subr.mxu0 0.0
    %1280 = vmatpush1.msra.mxu0 0.0
    %1281 = vmatprep.subr.mxu0 0.0
    %1282 = vmatpush1.msra.mxu0 0.0
    %1283 = vmatprep.subr.mxu0 0.0
    %1284 = vmatpush1.msra.mxu0 0.0
    %1285 = vmatprep.subr.mxu0 0.0
    %1286 = vmatpush1.msra.mxu0 0.0
    %1287 = vmatprep.subr.mxu0 0.0
    %1288 = vmatpush1.msra.mxu0 0.0
    %1289 = vmatprep.subr.mxu0 0.0
    %1290 = vmatpush1.msra.mxu0 0.0
    %1291 = vmatprep.subr.mxu0 0.0
    %1292 = vmatpush1.msra.mxu0 0.0
    %1293 = vmatprep.mubr.f32.mxu0 0.0
    %1294 = vmatmul.mubr.f32.gmra.mrb[0].mxu0 %v1224
    %v1295 = vpop.f32.mrb[0].mxu0
    %v1296 = vadd.f32 %v1221, %v1295
    %v1297 = vpop.f32.mrb[0].mxu0
    %1298 = vmatprep.mubr.f32.mxu0 0.0
    %1299 = vmatmul.mubr.f32.gmra.mrb[0].mxu0 %v1227
    %v1300 = vpop.f32.mrb[0].mxu0
    %v1301 = vadd.f32 %v1221, %v1300
    %v1302 = vpop.f32.mrb[0].mxu0
    %1303 = vdwg.mxu0
    %s1304 = scalar_lea.vmem %s8, 32
    %v1305 = vld [vmem:[%s1304] sm:$0xff]
    %v1306 = vld [vmem:[%s1304 + $0x8] sm:$0xff]
    %v1307 = vld [vmem:[%s1304 + $0x10] sm:$0xff]
    %v1308 = vld [vmem:[%s1304 + $0x18] sm:$0xff]
    %s1309 = scalar_lea.vmem %s9, 1
    %v1310 = vld [vmem:[%s1309] sm:$0x1]
    %1313 = vrot.lane.b32.xlu0 %v1296, 96
    %v1314 = vpop.permute.xlu0 %1313
    %1315 = vrot.lane.b32.xlu0 %v1301, 96
    %v1316 = vpop.permute.xlu0 %1315
    %v1317 = vsel %vm330, %v1296, 0
    %v1319 = vsel %vm330, %v1301, 0
    %v1321 = vsel %vm330, %v1314, 0
    %v1323 = vsel %vm330, %v1316, 0
    %1325 = vmatprep.subr.mxu0 0.0
    %1326 = vmatpush1.xpose.msra.mxu0 %v1321
    %1327 = vmatprep.subr.mxu0 0.0
    %1328 = vmatpush1.xpose.msra.mxu0 %v1323
    %1329 = vmatprep.subr.mxu0 0.0
    %1330 = vmatpush1.xpose.msra.mxu0 0.0
    %1331 = vmatprep.subr.mxu0 0.0
    %1332 = vmatpush1.xpose.msra.mxu0 0.0
    %1333 = vmatprep.subr.mxu0 0.0
    %1334 = vmatpush1.xpose.msra.mxu0 0.0
    %1335 = vmatprep.subr.mxu0 0.0
    %1336 = vmatpush1.xpose.msra.mxu0 0.0
    %1337 = vmatprep.subr.mxu0 0.0
    %1338 = vmatpush1.xpose.msra.mxu0 0.0
    %1339 = vmatprep.subr.mxu0 0.0
    %1340 = vmatpush1.xpose.msra.mxu0 0.0
    %1341 = vmatprep.subr.mxu0 0.0
    %1342 = vmatpush1.xpose.msra.mxu0 0.0
    %1343 = vmatprep.subr.mxu0 0.0
    %1344 = vmatpush1.xpose.msra.mxu0 0.0
    %1345 = vmatprep.subr.mxu0 0.0
    %1346 = vmatpush1.xpose.msra.mxu0 0.0
    %1347 = vmatprep.subr.mxu0 0.0
    %1348 = vmatpush1.xpose.msra.mxu0 0.0
    %1349 = vmatprep.subr.mxu0 0.0
    %1350 = vmatpush1.xpose.msra.mxu0 0.0
    %1351 = vmatprep.subr.mxu0 0.0
    %1352 = vmatpush1.xpose.msra.mxu0 0.0
    %1353 = vmatprep.subr.mxu0 0.0
    %1354 = vmatpush1.xpose.msra.mxu0 0.0
    %1355 = vmatprep.subr.mxu0 0.0
    %1356 = vmatpush1.xpose.msra.mxu0 0.0
    %1357 = vmatprep.subr.mxu0 0.0
    %1358 = vmatpush1.xpose.msra.mxu0 0.0
    %1359 = vmatprep.subr.mxu0 0.0
    %1360 = vmatpush1.xpose.msra.mxu0 0.0
    %1361 = vmatprep.subr.mxu0 0.0
    %1362 = vmatpush1.xpose.msra.mxu0 0.0
    %1363 = vmatprep.subr.mxu0 0.0
    %1364 = vmatpush1.xpose.msra.mxu0 0.0
    %1365 = vmatprep.subr.mxu0 0.0
    %1366 = vmatpush1.xpose.msra.mxu0 0.0
    %1367 = vmatprep.subr.mxu0 0.0
    %1368 = vmatpush1.xpose.msra.mxu0 0.0
    %1369 = vmatprep.subr.mxu0 0.0
    %1370 = vmatpush1.xpose.msra.mxu0 0.0
    %1371 = vmatprep.subr.mxu0 0.0
    %1372 = vmatpush1.xpose.msra.mxu0 0.0
    %1373 = vmatprep.subr.mxu0 0.0
    %1374 = vmatpush1.xpose.msra.mxu0 0.0
    %1375 = vmatprep.subr.mxu0 0.0
    %1376 = vmatpush1.xpose.msra.mxu0 0.0
    %1377 = vmatprep.subr.mxu0 0.0
    %1378 = vmatpush1.xpose.msra.mxu0 0.0
    %1379 = vmatprep.subr.mxu0 0.0
    %1380 = vmatpush1.xpose.msra.mxu0 0.0
    %1381 = vmatprep.subr.mxu0 0.0
    %1382 = vmatpush1.xpose.msra.mxu0 0.0
    %1383 = vmatprep.subr.mxu0 0.0
    %1384 = vmatpush1.xpose.msra.mxu0 0.0
    %1385 = vmatprep.subr.mxu0 0.0
    %1386 = vmatpush1.xpose.msra.mxu0 0.0
    %1387 = vmatprep.subr.mxu0 0.0
    %1388 = vmatpush1.xpose.msra.mxu0 0.0
    %1389 = vmatprep.mubr.f32.mxu0 0.0
    %1390 = vmatmul.mubr.f32.gmra.mrb[0].mxu0 %v1317
    %v1391 = vpop.f32.mrb[0].mxu0
    %v1392 = vadd.f32 0.0, %v1391
    %v1393 = vpop.f32.mrb[0].mxu0
    %1394 = vmatprep.mubr.f32.mxu0 0.0
    %1395 = vmatmul.mubr.f32.gmra.mrb[0].mxu0 %v1319
    %v1396 = vpop.f32.mrb[0].mxu0
    %v1397 = vadd.f32 0.0, %v1396
    %v1398 = vpop.f32.mrb[0].mxu0
    %1399 = vdwg.mxu0
    %v1400 = vmul.f32 %v1392, 0.25
    %v1401 = vmul.f32 %v1397, 0.25
    %v1402 = vadd.f32 %v1400, %v66
    %v1403 = vadd.f32 %v1401, %v67
    %v1404 = vsel %vm418, %v1402, -inf
    %1405 = vmax.xlane.f32.xlu0 %v1404
    %v1406 = vpop.xlane.xlu0 %1405
    %v1407 = vsel %vm422, %v1403, -inf
    %1408 = vmax.xlane.f32.xlu0 %v1407
    %v1409 = vpop.xlane.xlu0 %1408
    %v1410 = vsub.f32 %v1402, %v1406
    %v1411 = vsub.f32 %v1403, %v1409
    %v1412 = vmul.f32 %v1410, 1.442695
    %v1413 = vpow.pop %v1412
    %v1414 = vmul.f32 %v1411, 1.442695
    %v1415 = vpow.pop %v1414
    %v1416 = vsel %vm418, %v1413, 0.0
    %1417 = vadd.xlane.f32.xlu0 %v1416
    %v1418 = vpop.xlane.xlu0 %1417
    %v1419 = vsel %vm422, %v1415, 0.0
    %1420 = vadd.xlane.f32.xlu0 %v1419
    %v1421 = vpop.xlane.xlu0 %1420
    %v1422 = vrcp.pop %v1418
    %v1423 = vrcp.pop %v1421
    %v1424 = vmul.f32 %v1413, %v1422
    %v1425 = vmul.f32 %v1415, %v1423
    %1426 = vrot.lane.b32.xlu0 %v1296, 64
    %v1427 = vpop.permute.xlu0 %1426
    %1428 = vrot.lane.b32.xlu0 %v1301, 64
    %v1429 = vpop.permute.xlu0 %1428
    %v1432 = vsel %vm418, %v1424, 0
    %v1435 = vsel %vm418, %v1425, 0
    %v1437 = vsel %vm453, %v1429, 0
    %1439 = vmatprep.subr.mxu0 0.0
    %1440 = vmatpush1.msra.mxu0 %v1427
    %1441 = vmatprep.subr.mxu0 0.0
    %1442 = vmatpush1.msra.mxu0 %v1437
    %1443 = vmatprep.subr.mxu0 0.0
    %1444 = vmatpush1.msra.mxu0 0.0
    %1445 = vmatprep.subr.mxu0 0.0
    %1446 = vmatpush1.msra.mxu0 0.0
    %1447 = vmatprep.subr.mxu0 0.0
    %1448 = vmatpush1.msra.mxu0 0.0
    %1449 = vmatprep.subr.mxu0 0.0
    %1450 = vmatpush1.msra.mxu0 0.0
    %1451 = vmatprep.subr.mxu0 0.0
    %1452 = vmatpush1.msra.mxu0 0.0
    %1453 = vmatprep.subr.mxu0 0.0
    %1454 = vmatpush1.msra.mxu0 0.0
    %1455 = vmatprep.subr.mxu0 0.0
    %1456 = vmatpush1.msra.mxu0 0.0
    %1457 = vmatprep.subr.mxu0 0.0
    %1458 = vmatpush1.msra.mxu0 0.0
    %1459 = vmatprep.subr.mxu0 0.0
    %1460 = vmatpush1.msra.mxu0 0.0
    %1461 = vmatprep.subr.mxu0 0.0
    %1462 = vmatpush1.msra.mxu0 0.0
    %1463 = vmatprep.subr.mxu0 0.0
    %1464 = vmatpush1.msra.mxu0 0.0
    %1465 = vmatprep.subr.mxu0 0.0
    %1466 = vmatpush1.msra.mxu0 0.0
    %1467 = vmatprep.subr.mxu0 0.0
    %1468 = vmatpush1.msra.mxu0 0.0
    %1469 = vmatprep.subr.mxu0 0.0
    %1470 = vmatpush1.msra.mxu0 0.0
    %1471 = vmatprep.subr.mxu0 0.0
    %1472 = vmatpush1.msra.mxu0 0.0
    %1473 = vmatprep.subr.mxu0 0.0
    %1474 = vmatpush1.msra.mxu0 0.0
    %1475 = vmatprep.subr.mxu0 0.0
    %1476 = vmatpush1.msra.mxu0 0.0
    %1477 = vmatprep.subr.mxu0 0.0
    %1478 = vmatpush1.msra.mxu0 0.0
    %1479 = vmatprep.subr.mxu0 0.0
    %1480 = vmatpush1.msra.mxu0 0.0
    %1481 = vmatprep.subr.mxu0 0.0
    %1482 = vmatpush1.msra.mxu0 0.0
    %1483 = vmatprep.subr.mxu0 0.0
    %1484 = vmatpush1.msra.mxu0 0.0
    %1485 = vmatprep.subr.mxu0 0.0
    %1486 = vmatpush1.msra.mxu0 0.0
    %1487 = vmatprep.subr.mxu0 0.0
    %1488 = vmatpush1.msra.mxu0 0.0
    %1489 = vmatprep.subr.mxu0 0.0
    %1490 = vmatpush1.msra.mxu0 0.0
    %1491 = vmatprep.subr.mxu0 0.0
    %1492 = vmatpush1.msra.mxu0 0.0
    %1493 = vmatprep.subr.mxu0 0.0
    %1494 = vmatpush1.msra.mxu0 0.0
    %1495 = vmatprep.subr.mxu0 0.0
    %1496 = vmatpush1.msra.mxu0 0.0
    %1497 = vmatprep.subr.mxu0 0.0
    %1498 = vmatpush1.msra.mxu0 0.0
    %1499 = vmatprep.subr.mxu0 0.0
    %1500 = vmatpush1.msra.mxu0 0.0
    %1501 = vmatprep.subr.mxu0 0.0
    %1502 = vmatpush1.msra.mxu0 0.0
    %1503 = vmatprep.mubr.f32.mxu0 0.0
    %1504 = vmatmul.mubr.f32.gmra.mrb[0].mxu0 %v1432
    %v1505 = vpop.f32.mrb[0].mxu0
    %v1506 = vadd.f32 0.0, %v1505
    %v1507 = vpop.f32.mrb[0].mxu0
    %1508 = vmatprep.mubr.f32.mxu0 0.0
    %1509 = vmatmul.mubr.f32.gmra.mrb[0].mxu0 %v1435
    %v1510 = vpop.f32.mrb[0].mxu0
    %v1511 = vadd.f32 0.0, %v1510
    %v1512 = vpop.f32.mrb[0].mxu0
    %1513 = vdwg.mxu0
    %v1515 = vsel %vm330, %v1506, 0
    %v1518 = vsel %vm330, %v1511, 0
    %1520 = vmatprep.subr.mxu0 0.0
    %1521 = vmatpush1.msra.mxu0 %v1305
    %1522 = vmatprep.subr.mxu0 0.0
    %1523 = vmatpush1.msra.mxu0 %v1306
    %1524 = vmatprep.subr.mxu0 0.0
    %1525 = vmatpush1.msra.mxu0 0.0
    %1526 = vmatprep.subr.mxu0 0.0
    %1527 = vmatpush1.msra.mxu0 0.0
    %1528 = vmatprep.subr.mxu0 0.0
    %1529 = vmatpush1.msra.mxu0 0.0
    %1530 = vmatprep.subr.mxu0 0.0
    %1531 = vmatpush1.msra.mxu0 0.0
    %1532 = vmatprep.subr.mxu0 0.0
    %1533 = vmatpush1.msra.mxu0 0.0
    %1534 = vmatprep.subr.mxu0 0.0
    %1535 = vmatpush1.msra.mxu0 0.0
    %1536 = vmatprep.subr.mxu0 0.0
    %1537 = vmatpush1.msra.mxu0 0.0
    %1538 = vmatprep.subr.mxu0 0.0
    %1539 = vmatpush1.msra.mxu0 0.0
    %1540 = vmatprep.subr.mxu0 0.0
    %1541 = vmatpush1.msra.mxu0 0.0
    %1542 = vmatprep.subr.mxu0 0.0
    %1543 = vmatpush1.msra.mxu0 0.0
    %1544 = vmatprep.subr.mxu0 0.0
    %1545 = vmatpush1.msra.mxu0 0.0
    %1546 = vmatprep.subr.mxu0 0.0
    %1547 = vmatpush1.msra.mxu0 0.0
    %1548 = vmatprep.subr.mxu0 0.0
    %1549 = vmatpush1.msra.mxu0 0.0
    %1550 = vmatprep.subr.mxu0 0.0
    %1551 = vmatpush1.msra.mxu0 0.0
    %1552 = vmatprep.subr.mxu0 0.0
    %1553 = vmatpush1.msra.mxu0 0.0
    %1554 = vmatprep.subr.mxu0 0.0
    %1555 = vmatpush1.msra.mxu0 0.0
    %1556 = vmatprep.subr.mxu0 0.0
    %1557 = vmatpush1.msra.mxu0 0.0
    %1558 = vmatprep.subr.mxu0 0.0
    %1559 = vmatpush1.msra.mxu0 0.0
    %1560 = vmatprep.subr.mxu0 0.0
    %1561 = vmatpush1.msra.mxu0 0.0
    %1562 = vmatprep.subr.mxu0 0.0
    %1563 = vmatpush1.msra.mxu0 0.0
    %1564 = vmatprep.subr.mxu0 0.0
    %1565 = vmatpush1.msra.mxu0 0.0
    %1566 = vmatprep.subr.mxu0 0.0
    %1567 = vmatpush1.msra.mxu0 0.0
    %1568 = vmatprep.subr.mxu0 0.0
    %1569 = vmatpush1.msra.mxu0 0.0
    %1570 = vmatprep.subr.mxu0 0.0
    %1571 = vmatpush1.msra.mxu0 0.0
    %1572 = vmatprep.subr.mxu0 0.0
    %1573 = vmatpush1.msra.mxu0 0.0
    %1574 = vmatprep.subr.mxu0 0.0
    %1575 = vmatpush1.msra.mxu0 0.0
    %1576 = vmatprep.subr.mxu0 0.0
    %1577 = vmatpush1.msra.mxu0 0.0
    %1578 = vmatprep.subr.mxu0 0.0
    %1579 = vmatpush1.msra.mxu0 0.0
    %1580 = vmatprep.subr.mxu0 0.0
    %1581 = vmatpush1.msra.mxu0 0.0
    %1582 = vmatprep.subr.mxu0 0.0
    %1583 = vmatpush1.msra.mxu0 0.0
    %1584 = vmatprep.mubr.f32.mxu0 0.0
    %1585 = vmatmul.mubr.f32.gmra.mrb[0].mxu0 %v1515
    %v1586 = vpop.f32.mrb[0].mxu0
    %v1587 = vadd.f32 0.0, %v1586
    %v1588 = vpop.f32.mrb[0].mxu0
    %1589 = vmatprep.mubr.f32.mxu0 0.0
    %1590 = vmatmul.mubr.f32.gmra.mrb[0].mxu0 %v1518
    %v1591 = vpop.f32.mrb[0].mxu0
    %v1592 = vadd.f32 0.0, %v1591
    %v1593 = vpop.f32.mrb[0].mxu0
    %1594 = vdwg.mxu0
    %v1596 = vlaneseq
    %v1597 = vshrl.u32 %v1596, 7
    %v1598 = vsub.s32 0, %v1597
    %v1599 = vrot.slane %v1310, %v1598
    %v1601 = vadd.f32 %v1599, %v1587
    %v1602 = vadd.f32 %v1599, %v1592
    %1603 = vrot.lane.b32.xlu0 %v1296, 112
    %v1604 = vpop.permute.xlu0 %1603
    %1605 = vrot.lane.b32.xlu0 %v1301, 112
    %v1606 = vpop.permute.xlu0 %1605
    %1607 = vrot.lane.b32.xlu0 %v1296, 80
    %v1608 = vpop.permute.xlu0 %1607
    %1609 = vrot.lane.b32.xlu0 %v1301, 80
    %v1610 = vpop.permute.xlu0 %1609
    %v1611 = vsel %vm330, %v1604, 0
    %v1613 = vsel %vm330, %v1606, 0
    %v1615 = vsel %vm330, %v1608, 0
    %v1617 = vsel %vm330, %v1610, 0
    %1619 = vmatprep.subr.mxu0 0.0
    %1620 = vmatpush1.xpose.msra.mxu0 %v1615
    %1621 = vmatprep.subr.mxu0 0.0
    %1622 = vmatpush1.xpose.msra.mxu0 %v1617
    %1623 = vmatprep.subr.mxu0 0.0
    %1624 = vmatpush1.xpose.msra.mxu0 0.0
    %1625 = vmatprep.subr.mxu0 0.0
    %1626 = vmatpush1.xpose.msra.mxu0 0.0
    %1627 = vmatprep.subr.mxu0 0.0
    %1628 = vmatpush1.xpose.msra.mxu0 0.0
    %1629 = vmatprep.subr.mxu0 0.0
    %1630 = vmatpush1.xpose.msra.mxu0 0.0
    %1631 = vmatprep.subr.mxu0 0.0
    %1632 = vmatpush1.xpose.msra.mxu0 0.0
    %1633 = vmatprep.subr.mxu0 0.0
    %1634 = vmatpush1.xpose.msra.mxu0 0.0
    %1635 = vmatprep.subr.mxu0 0.0
    %1636 = vmatpush1.xpose.msra.mxu0 0.0
    %1637 = vmatprep.subr.mxu0 0.0
    %1638 = vmatpush1.xpose.msra.mxu0 0.0
    %1639 = vmatprep.subr.mxu0 0.0
    %1640 = vmatpush1.xpose.msra.mxu0 0.0
    %1641 = vmatprep.subr.mxu0 0.0
    %1642 = vmatpush1.xpose.msra.mxu0 0.0
    %1643 = vmatprep.subr.mxu0 0.0
    %1644 = vmatpush1.xpose.msra.mxu0 0.0
    %1645 = vmatprep.subr.mxu0 0.0
    %1646 = vmatpush1.xpose.msra.mxu0 0.0
    %1647 = vmatprep.subr.mxu0 0.0
    %1648 = vmatpush1.xpose.msra.mxu0 0.0
    %1649 = vmatprep.subr.mxu0 0.0
    %1650 = vmatpush1.xpose.msra.mxu0 0.0
    %1651 = vmatprep.subr.mxu0 0.0
    %1652 = vmatpush1.xpose.msra.mxu0 0.0
    %1653 = vmatprep.subr.mxu0 0.0
    %1654 = vmatpush1.xpose.msra.mxu0 0.0
    %1655 = vmatprep.subr.mxu0 0.0
    %1656 = vmatpush1.xpose.msra.mxu0 0.0
    %1657 = vmatprep.subr.mxu0 0.0
    %1658 = vmatpush1.xpose.msra.mxu0 0.0
    %1659 = vmatprep.subr.mxu0 0.0
    %1660 = vmatpush1.xpose.msra.mxu0 0.0
    %1661 = vmatprep.subr.mxu0 0.0
    %1662 = vmatpush1.xpose.msra.mxu0 0.0
    %1663 = vmatprep.subr.mxu0 0.0
    %1664 = vmatpush1.xpose.msra.mxu0 0.0
    %1665 = vmatprep.subr.mxu0 0.0
    %1666 = vmatpush1.xpose.msra.mxu0 0.0
    %1667 = vmatprep.subr.mxu0 0.0
    %1668 = vmatpush1.xpose.msra.mxu0 0.0
    %1669 = vmatprep.subr.mxu0 0.0
    %1670 = vmatpush1.xpose.msra.mxu0 0.0
    %1671 = vmatprep.subr.mxu0 0.0
    %1672 = vmatpush1.xpose.msra.mxu0 0.0
    %1673 = vmatprep.subr.mxu0 0.0
    %1674 = vmatpush1.xpose.msra.mxu0 0.0
    %1675 = vmatprep.subr.mxu0 0.0
    %1676 = vmatpush1.xpose.msra.mxu0 0.0
    %1677 = vmatprep.subr.mxu0 0.0
    %1678 = vmatpush1.xpose.msra.mxu0 0.0
    %1679 = vmatprep.subr.mxu0 0.0
    %1680 = vmatpush1.xpose.msra.mxu0 0.0
    %1681 = vmatprep.subr.mxu0 0.0
    %1682 = vmatpush1.xpose.msra.mxu0 0.0
    %1683 = vmatprep.mubr.f32.mxu0 0.0
    %1684 = vmatmul.mubr.f32.gmra.mrb[0].mxu0 %v1611
    %v1685 = vpop.f32.mrb[0].mxu0
    %v1686 = vadd.f32 0.0, %v1685
    %v1687 = vpop.f32.mrb[0].mxu0
    %1688 = vmatprep.mubr.f32.mxu0 0.0
    %1689 = vmatmul.mubr.f32.gmra.mrb[0].mxu0 %v1613
    %v1690 = vpop.f32.mrb[0].mxu0
    %v1691 = vadd.f32 0.0, %v1690
    %v1692 = vpop.f32.mrb[0].mxu0
    %1693 = vdwg.mxu0
    %v1694 = vmul.f32 %v1686, 0.25
    %v1695 = vmul.f32 %v1691, 0.25
    %v1696 = vadd.f32 %v1694, %v66
    %v1697 = vadd.f32 %v1695, %v67
    %v1698 = vsel %vm418, %v1696, -inf
    %1699 = vmax.xlane.f32.xlu0 %v1698
    %v1700 = vpop.xlane.xlu0 %1699
    %v1701 = vsel %vm422, %v1697, -inf
    %1702 = vmax.xlane.f32.xlu0 %v1701
    %v1703 = vpop.xlane.xlu0 %1702
    %v1704 = vsub.f32 %v1696, %v1700
    %v1705 = vsub.f32 %v1697, %v1703
    %v1706 = vmul.f32 %v1704, 1.442695
    %v1707 = vpow.pop %v1706
    %v1708 = vmul.f32 %v1705, 1.442695
    %v1709 = vpow.pop %v1708
    %v1710 = vsel %vm418, %v1707, 0.0
    %1711 = vadd.xlane.f32.xlu0 %v1710
    %v1712 = vpop.xlane.xlu0 %1711
    %v1713 = vsel %vm422, %v1709, 0.0
    %1714 = vadd.xlane.f32.xlu0 %v1713
    %v1715 = vpop.xlane.xlu0 %1714
    %v1716 = vrcp.pop %v1712
    %v1717 = vrcp.pop %v1715
    %v1718 = vmul.f32 %v1707, %v1716
    %v1719 = vmul.f32 %v1709, %v1717
    %1720 = vrot.lane.b32.xlu0 %v1296, 48
    %v1721 = vpop.permute.xlu0 %1720
    %1722 = vrot.lane.b32.xlu0 %v1301, 48
    %v1723 = vpop.permute.xlu0 %1722
    %v1726 = vsel %vm418, %v1718, 0
    %v1729 = vsel %vm418, %v1719, 0
    %v1731 = vsel %vm453, %v1723, 0
    %1733 = vmatprep.subr.mxu0 0.0
    %1734 = vmatpush1.msra.mxu0 %v1721
    %1735 = vmatprep.subr.mxu0 0.0
    %1736 = vmatpush1.msra.mxu0 %v1731
    %1737 = vmatprep.subr.mxu0 0.0
    %1738 = vmatpush1.msra.mxu0 0.0
    %1739 = vmatprep.subr.mxu0 0.0
    %1740 = vmatpush1.msra.mxu0 0.0
    %1741 = vmatprep.subr.mxu0 0.0
    %1742 = vmatpush1.msra.mxu0 0.0
    %1743 = vmatprep.subr.mxu0 0.0
    %1744 = vmatpush1.msra.mxu0 0.0
    %1745 = vmatprep.subr.mxu0 0.0
    %1746 = vmatpush1.msra.mxu0 0.0
    %1747 = vmatprep.subr.mxu0 0.0
    %1748 = vmatpush1.msra.mxu0 0.0
    %1749 = vmatprep.subr.mxu0 0.0
    %1750 = vmatpush1.msra.mxu0 0.0
    %1751 = vmatprep.subr.mxu0 0.0
    %1752 = vmatpush1.msra.mxu0 0.0
    %1753 = vmatprep.subr.mxu0 0.0
    %1754 = vmatpush1.msra.mxu0 0.0
    %1755 = vmatprep.subr.mxu0 0.0
    %1756 = vmatpush1.msra.mxu0 0.0
    %1757 = vmatprep.subr.mxu0 0.0
    %1758 = vmatpush1.msra.mxu0 0.0
    %1759 = vmatprep.subr.mxu0 0.0
    %1760 = vmatpush1.msra.mxu0 0.0
    %1761 = vmatprep.subr.mxu0 0.0
    %1762 = vmatpush1.msra.mxu0 0.0
    %1763 = vmatprep.subr.mxu0 0.0
    %1764 = vmatpush1.msra.mxu0 0.0
    %1765 = vmatprep.subr.mxu0 0.0
    %1766 = vmatpush1.msra.mxu0 0.0
    %1767 = vmatprep.subr.mxu0 0.0
    %1768 = vmatpush1.msra.mxu0 0.0
    %1769 = vmatprep.subr.mxu0 0.0
    %1770 = vmatpush1.msra.mxu0 0.0
    %1771 = vmatprep.subr.mxu0 0.0
    %1772 = vmatpush1.msra.mxu0 0.0
    %1773 = vmatprep.subr.mxu0 0.0
    %1774 = vmatpush1.msra.mxu0 0.0
    %1775 = vmatprep.subr.mxu0 0.0
    %1776 = vmatpush1.msra.mxu0 0.0
    %1777 = vmatprep.subr.mxu0 0.0
    %1778 = vmatpush1.msra.mxu0 0.0
    %1779 = vmatprep.subr.mxu0 0.0
    %1780 = vmatpush1.msra.mxu0 0.0
    %1781 = vmatprep.subr.mxu0 0.0
    %1782 = vmatpush1.msra.mxu0 0.0
    %1783 = vmatprep.subr.mxu0 0.0
    %1784 = vmatpush1.msra.mxu0 0.0
    %1785 = vmatprep.subr.mxu0 0.0
    %1786 = vmatpush1.msra.mxu0 0.0
    %1787 = vmatprep.subr.mxu0 0.0
    %1788 = vmatpush1.msra.mxu0 0.0
    %1789 = vmatprep.subr.mxu0 0.0
    %1790 = vmatpush1.msra.mxu0 0.0
    %1791 = vmatprep.subr.mxu0 0.0
    %1792 = vmatpush1.msra.mxu0 0.0
    %1793 = vmatprep.subr.mxu0 0.0
    %1794 = vmatpush1.msra.mxu0 0.0
    %1795 = vmatprep.subr.mxu0 0.0
    %1796 = vmatpush1.msra.mxu0 0.0
    %1797 = vmatprep.mubr.f32.mxu0 0.0
    %1798 = vmatmul.mubr.f32.gmra.mrb[0].mxu0 %v1726
    %v1799 = vpop.f32.mrb[0].mxu0
    %v1800 = vadd.f32 0.0, %v1799
    %v1801 = vpop.f32.mrb[0].mxu0
    %1802 = vmatprep.mubr.f32.mxu0 0.0
    %1803 = vmatmul.mubr.f32.gmra.mrb[0].mxu0 %v1729
    %v1804 = vpop.f32.mrb[0].mxu0
    %v1805 = vadd.f32 0.0, %v1804
    %v1806 = vpop.f32.mrb[0].mxu0
    %1807 = vdwg.mxu0
    %v1809 = vsel %vm330, %v1800, 0
    %v1812 = vsel %vm330, %v1805, 0
    %1814 = vmatprep.subr.mxu0 0.0
    %1815 = vmatpush1.msra.mxu0 %v1307
    %1816 = vmatprep.subr.mxu0 0.0
    %1817 = vmatpush1.msra.mxu0 %v1308
    %1818 = vmatprep.subr.mxu0 0.0
    %1819 = vmatpush1.msra.mxu0 0.0
    %1820 = vmatprep.subr.mxu0 0.0
    %1821 = vmatpush1.msra.mxu0 0.0
    %1822 = vmatprep.subr.mxu0 0.0
    %1823 = vmatpush1.msra.mxu0 0.0
    %1824 = vmatprep.subr.mxu0 0.0
    %1825 = vmatpush1.msra.mxu0 0.0
    %1826 = vmatprep.subr.mxu0 0.0
    %1827 = vmatpush1.msra.mxu0 0.0
    %1828 = vmatprep.subr.mxu0 0.0
    %1829 = vmatpush1.msra.mxu0 0.0
    %1830 = vmatprep.subr.mxu0 0.0
    %1831 = vmatpush1.msra.mxu0 0.0
    %1832 = vmatprep.subr.mxu0 0.0
    %1833 = vmatpush1.msra.mxu0 0.0
    %1834 = vmatprep.subr.mxu0 0.0
    %1835 = vmatpush1.msra.mxu0 0.0
    %1836 = vmatprep.subr.mxu0 0.0
    %1837 = vmatpush1.msra.mxu0 0.0
    %1838 = vmatprep.subr.mxu0 0.0
    %1839 = vmatpush1.msra.mxu0 0.0
    %1840 = vmatprep.subr.mxu0 0.0
    %1841 = vmatpush1.msra.mxu0 0.0
    %1842 = vmatprep.subr.mxu0 0.0
    %1843 = vmatpush1.msra.mxu0 0.0
    %1844 = vmatprep.subr.mxu0 0.0
    %1845 = vmatpush1.msra.mxu0 0.0
    %1846 = vmatprep.subr.mxu0 0.0
    %1847 = vmatpush1.msra.mxu0 0.0
    %1848 = vmatprep.subr.mxu0 0.0
    %1849 = vmatpush1.msra.mxu0 0.0
    %1850 = vmatprep.subr.mxu0 0.0
    %1851 = vmatpush1.msra.mxu0 0.0
    %1852 = vmatprep.subr.mxu0 0.0
    %1853 = vmatpush1.msra.mxu0 0.0
    %1854 = vmatprep.subr.mxu0 0.0
    %1855 = vmatpush1.msra.mxu0 0.0
    %1856 = vmatprep.subr.mxu0 0.0
    %1857 = vmatpush1.msra.mxu0 0.0
    %1858 = vmatprep.subr.mxu0 0.0
    %1859 = vmatpush1.msra.mxu0 0.0
    %1860 = vmatprep.subr.mxu0 0.0
    %1861 = vmatpush1.msra.mxu0 0.0
    %1862 = vmatprep.subr.mxu0 0.0
    %1863 = vmatpush1.msra.mxu0 0.0
    %1864 = vmatprep.subr.mxu0 0.0
    %1865 = vmatpush1.msra.mxu0 0.0
    %1866 = vmatprep.subr.mxu0 0.0
    %1867 = vmatpush1.msra.mxu0 0.0
    %1868 = vmatprep.subr.mxu0 0.0
    %1869 = vmatpush1.msra.mxu0 0.0
    %1870 = vmatprep.subr.mxu0 0.0
    %1871 = vmatpush1.msra.mxu0 0.0
    %1872 = vmatprep.subr.mxu0 0.0
    %1873 = vmatpush1.msra.mxu0 0.0
    %1874 = vmatprep.subr.mxu0 0.0
    %1875 = vmatpush1.msra.mxu0 0.0
    %1876 = vmatprep.subr.mxu0 0.0
    %1877 = vmatpush1.msra.mxu0 0.0
    %1878 = vmatprep.mubr.f32.mxu0 0.0
    %1879 = vmatmul.mubr.f32.gmra.mrb[0].mxu0 %v1809
    %v1880 = vpop.f32.mrb[0].mxu0
    %v1881 = vadd.f32 0.0, %v1880
    %v1882 = vpop.f32.mrb[0].mxu0
    %1883 = vmatprep.mubr.f32.mxu0 0.0
    %1884 = vmatmul.mubr.f32.gmra.mrb[0].mxu0 %v1812
    %v1885 = vpop.f32.mrb[0].mxu0
    %v1886 = vadd.f32 0.0, %v1885
    %v1887 = vpop.f32.mrb[0].mxu0
    %1888 = vdwg.mxu0
    %v1889 = vadd.f32 %v1601, %v1881
    %v1890 = vadd.f32 %v1602, %v1886
    %v1891 = vadd.f32 %v1162, %v1889
    %v1892 = vadd.f32 %v1163, %v1890
    %s1893 = scalar_lea.vmem %s10, 1
    %v1894 = vld [vmem:[%s1893] sm:$0x1]
    %s1895 = scalar_lea.vmem %s11, 1
    %v1896 = vld [vmem:[%s1895] sm:$0x1]
    %v1897 = vsel %vm182, %v1891, 0.0
    %1898 = vadd.xlane.f32.xlu0 %v1897
    %v1899 = vpop.xlane.xlu0 %1898
    %v1900 = vsel %vm186, %v1892, 0.0
    %1901 = vadd.xlane.f32.xlu0 %v1900
    %v1902 = vpop.xlane.xlu0 %1901
    %v1903 = vmul.f32 %v1899, %v190
    %v1904 = vmul.f32 %v1902, %v190
    %v1905 = vsub.f32 %v1891, %v1903
    %v1906 = vsub.f32 %v1892, %v1904
    %v1907 = vmul.f32 %v1905, %v1905
    %v1908 = vmul.f32 %v1906, %v1906
    %v1909 = vsel %vm182, %v1907, 0.0
    %1910 = vadd.xlane.f32.xlu0 %v1909
    %v1911 = vpop.xlane.xlu0 %1910
    %v1912 = vsel %vm186, %v1908, 0.0
    %1913 = vadd.xlane.f32.xlu0 %v1912
    %v1914 = vpop.xlane.xlu0 %1913
    %v1915 = vmul.f32 %v1911, %v190
    %v1916 = vmul.f32 %v1914, %v190
    %v1917 = vadd.f32 %v1915, 1e-12
    %v1918 = vadd.f32 %v1916, 1e-12
    %v1919 = vrsqrt.pop %v1917
    %v1920 = vrsqrt.pop %v1918
    %v1921 = vmul.f32 %v1905, %v1919
    %v1922 = vmul.f32 %v1906, %v1920
    %v1924 = vlaneseq
    %v1925 = vshrl.u32 %v1924, 7
    %v1926 = vsub.s32 0, %v1925
    %v1927 = vrot.slane %v1894, %v1926
    %v1929 = vmul.f32 %v1921, %v1927
    %v1930 = vmul.f32 %v1922, %v1927
    %v1932 = vlaneseq
    %v1933 = vshrl.u32 %v1932, 7
    %v1934 = vsub.s32 0, %v1933
    %v1935 = vrot.slane %v1896, %v1934
    %v1937 = vadd.f32 %v1929, %v1935
    %v1938 = vadd.f32 %v1930, %v1935
    %s1939 = scalar_lea.vmem %s12, 32
    %v1940 = vld [vmem:[%s1939] sm:$0xff]
    %v1941 = vld [vmem:[%s1939 + $0x8] sm:$0xff]
    %v1942 = vld [vmem:[%s1939 + $0x10] sm:$0xff]
    %v1943 = vld [vmem:[%s1939 + $0x18] sm:$0xff]
    %s1944 = scalar_lea.vmem %s13, 1
    %v1945 = vld [vmem:[%s1944] sm:$0x1]
    %v1947 = vlaneseq
    %v1948 = vshrl.u32 %v1947, 7
    %v1949 = vsub.s32 0, %v1948
    %v1950 = vrot.slane %v1945, %v1949
    %v1953 = vsel %vm182, %v1937, 0
    %v1956 = vsel %vm182, %v1938, 0
    %1958 = vmatprep.subr.mxu0 0.0
    %1959 = vmatpush1.msra.mxu0 %v1940
    %1960 = vmatprep.subr.mxu0 0.0
    %1961 = vmatpush1.msra.mxu0 %v1941
    %1962 = vmatprep.subr.mxu0 0.0
    %1963 = vmatpush1.msra.mxu0 %v1942
    %1964 = vmatprep.subr.mxu0 0.0
    %1965 = vmatpush1.msra.mxu0 %v1943
    %1966 = vmatprep.subr.mxu0 0.0
    %1967 = vmatpush1.msra.mxu0 0.0
    %1968 = vmatprep.subr.mxu0 0.0
    %1969 = vmatpush1.msra.mxu0 0.0
    %1970 = vmatprep.subr.mxu0 0.0
    %1971 = vmatpush1.msra.mxu0 0.0
    %1972 = vmatprep.subr.mxu0 0.0
    %1973 = vmatpush1.msra.mxu0 0.0
    %1974 = vmatprep.subr.mxu0 0.0
    %1975 = vmatpush1.msra.mxu0 0.0
    %1976 = vmatprep.subr.mxu0 0.0
    %1977 = vmatpush1.msra.mxu0 0.0
    %1978 = vmatprep.subr.mxu0 0.0
    %1979 = vmatpush1.msra.mxu0 0.0
    %1980 = vmatprep.subr.mxu0 0.0
    %1981 = vmatpush1.msra.mxu0 0.0
    %1982 = vmatprep.subr.mxu0 0.0
    %1983 = vmatpush1.msra.mxu0 0.0
    %1984 = vmatprep.subr.mxu0 0.0
    %1985 = vmatpush1.msra.mxu0 0.0
    %1986 = vmatprep.subr.mxu0 0.0
    %1987 = vmatpush1.msra.mxu0 0.0
    %1988 = vmatprep.subr.mxu0 0.0
    %1989 = vmatpush1.msra.mxu0 0.0
    %1990 = vmatprep.subr.mxu0 0.0
    %1991 = vmatpush1.msra.mxu0 0.0
    %1992 = vmatprep.subr.mxu0 0.0
    %1993 = vmatpush1.msra.mxu0 0.0
    %1994 = vmatprep.subr.mxu0 0.0
    %1995 = vmatpush1.msra.mxu0 0.0
    %1996 = vmatprep.subr.mxu0 0.0
    %1997 = vmatpush1.msra.mxu0 0.0
    %1998 = vmatprep.subr.mxu0 0.0
    %1999 = vmatpush1.msra.mxu0 0.0
    %2000 = vmatprep.subr.mxu0 0.0
    %2001 = vmatpush1.msra.mxu0 0.0
    %2002 = vmatprep.subr.mxu0 0.0
    %2003 = vmatpush1.msra.mxu0 0.0
    %2004 = vmatprep.subr.mxu0 0.0
    %2005 = vmatpush1.msra.mxu0 0.0
    %2006 = vmatprep.subr.mxu0 0.0
    %2007 = vmatpush1.msra.mxu0 0.0
    %2008 = vmatprep.subr.mxu0 0.0
    %2009 = vmatpush1.msra.mxu0 0.0
    %2010 = vmatprep.subr.mxu0 0.0
    %2011 = vmatpush1.msra.mxu0 0.0
    %2012 = vmatprep.subr.mxu0 0.0
    %2013 = vmatpush1.msra.mxu0 0.0
    %2014 = vmatprep.subr.mxu0 0.0
    %2015 = vmatpush1.msra.mxu0 0.0
    %2016 = vmatprep.subr.mxu0 0.0
    %2017 = vmatpush1.msra.mxu0 0.0
    %2018 = vmatprep.subr.mxu0 0.0
    %2019 = vmatpush1.msra.mxu0 0.0
    %2020 = vmatprep.subr.mxu0 0.0
    %2021 = vmatpush1.msra.mxu0 0.0
    %2022 = vmatprep.mubr.f32.mxu0 0.0
    %2023 = vmatmul.mubr.f32.gmra.mrb[0].mxu0 %v1953
    %v2024 = vpop.f32.mrb[0].mxu0
    %v2025 = vadd.f32 %v1950, %v2024
    %v2026 = vpop.f32.mrb[0].mxu0
    %2027 = vmatprep.mubr.f32.mxu0 0.0
    %2028 = vmatmul.mubr.f32.gmra.mrb[0].mxu0 %v1956
    %v2029 = vpop.f32.mrb[0].mxu0
    %v2030 = vadd.f32 %v1950, %v2029
    %v2031 = vpop.f32.mrb[0].mxu0
    %2032 = vdwg.mxu0
    %v2033 = vmul.f32 %v2025, 0.5
    %v2034 = vmul.f32 %v2030, 0.5
    %v2035 = vmul.f32 %v2025, 0.044715
    %v2036 = vmul.f32 %v2030, 0.044715
    %v2037 = vmul.f32 %v2035, %v2025
    %v2038 = vmul.f32 %v2036, %v2030
    %v2039 = vmul.f32 %v2037, %v2025
    %v2040 = vmul.f32 %v2038, %v2030
    %v2041 = vadd.f32 %v2025, %v2039
    %v2042 = vadd.f32 %v2030, %v2040
    %v2043 = vmul.f32 %v2041, 0.7978846
    %v2044 = vmul.f32 %v2042, 0.7978846
    %v2045 = vtanh.pop %v2043
    %v2046 = vtanh.pop %v2044
    %v2047 = vadd.f32 %v2045, 1.0
    %v2048 = vadd.f32 %v2046, 1.0
    %v2049 = vmul.f32 %v2033, %v2047
    %v2050 = vmul.f32 %v2034, %v2048
    %s2051 = scalar_lea.vmem %s14, 64
    %v2052 = vld [vmem:[%s2051] sm:$0xff]
    %v2053 = vld [vmem:[%s2051 + $0x8] sm:$0xff]
    %v2054 = vld [vmem:[%s2051 + $0x10] sm:$0xff]
    %v2055 = vld [vmem:[%s2051 + $0x18] sm:$0xff]
    %v2056 = vld [vmem:[%s2051 + $0x20] sm:$0xff]
    %v2057 = vld [vmem:[%s2051 + $0x28] sm:$0xff]
    %v2058 = vld [vmem:[%s2051 + $0x30] sm:$0xff]
    %v2059 = vld [vmem:[%s2051 + $0x38] sm:$0xff]
    %v2061 = vsel %vm98, %v2049, 0
    %v2064 = vsel %vm98, %v2050, 0
    %2066 = vmatprep.subr.mxu0 0.0
    %2067 = vmatpush1.msra.mxu0 %v2052
    %2068 = vmatprep.subr.mxu0 0.0
    %2069 = vmatpush1.msra.mxu0 %v2053
    %2070 = vmatprep.subr.mxu0 0.0
    %2071 = vmatpush1.msra.mxu0 %v2054
    %2072 = vmatprep.subr.mxu0 0.0
    %2073 = vmatpush1.msra.mxu0 %v2055
    %2074 = vmatprep.subr.mxu0 0.0
    %2075 = vmatpush1.msra.mxu0 %v2056
    %2076 = vmatprep.subr.mxu0 0.0
    %2077 = vmatpush1.msra.mxu0 %v2057
    %2078 = vmatprep.subr.mxu0 0.0
    %2079 = vmatpush1.msra.mxu0 %v2058
    %2080 = vmatprep.subr.mxu0 0.0
    %2081 = vmatpush1.msra.mxu0 %v2059
    %2082 = vmatprep.subr.mxu0 0.0
    %2083 = vmatpush1.msra.mxu0 0.0
    %2084 = vmatprep.subr.mxu0 0.0
    %2085 = vmatpush1.msra.mxu0 0.0
    %2086 = vmatprep.subr.mxu0 0.0
    %2087 = vmatpush1.msra.mxu0 0.0
    %2088 = vmatprep.subr.mxu0 0.0
    %2089 = vmatpush1.msra.mxu0 0.0
    %2090 = vmatprep.subr.mxu0 0.0
    %2091 = vmatpush1.msra.mxu0 0.0
    %2092 = vmatprep.subr.mxu0 0.0
    %2093 = vmatpush1.msra.mxu0 0.0
    %2094 = vmatprep.subr.mxu0 0.0
    %2095 = vmatpush1.msra.mxu0 0.0
    %2096 = vmatprep.subr.mxu0 0.0
    %2097 = vmatpush1.msra.mxu0 0.0
    %2098 = vmatprep.subr.mxu0 0.0
    %2099 = vmatpush1.msra.mxu0 0.0
    %2100 = vmatprep.subr.mxu0 0.0
    %2101 = vmatpush1.msra.mxu0 0.0
    %2102 = vmatprep.subr.mxu0 0.0
    %2103 = vmatpush1.msra.mxu0 0.0
    %2104 = vmatprep.subr.mxu0 0.0
    %2105 = vmatpush1.msra.mxu0 0.0
    %2106 = vmatprep.subr.mxu0 0.0
    %2107 = vmatpush1.msra.mxu0 0.0
    %2108 = vmatprep.subr.mxu0 0.0
    %2109 = vmatpush1.msra.mxu0 0.0
    %2110 = vmatprep.subr.mxu0 0.0
    %2111 = vmatpush1.msra.mxu0 0.0
    %2112 = vmatprep.subr.mxu0 0.0
    %2113 = vmatpush1.msra.mxu0 0.0
    %2114 = vmatprep.subr.mxu0 0.0
    %2115 = vmatpush1.msra.mxu0 0.0
    %2116 = vmatprep.subr.mxu0 0.0
    %2117 = vmatpush1.msra.mxu0 0.0
    %2118 = vmatprep.subr.mxu0 0.0
    %2119 = vmatpush1.msra.mxu0 0.0
    %2120 = vmatprep.subr.mxu0 0.0
    %2121 = vmatpush1.msra.mxu0 0.0
    %2122 = vmatprep.subr.mxu0 0.0
    %2123 = vmatpush1.msra.mxu0 0.0
    %2124 = vmatprep.subr.mxu0 0.0
    %2125 = vmatpush1.msra.mxu0 0.0
    %2126 = vmatprep.subr.mxu0 0.0
    %2127 = vmatpush1.msra.mxu0 0.0
    %2128 = vmatprep.subr.mxu0 0.0
    %2129 = vmatpush1.msra.mxu0 0.0
    %2130 = vmatprep.mubr.f32.mxu0 0.0
    %2131 = vmatmul.mubr.f32.gmra.mrb[0].mxu0 %v2061
    %v2132 = vpop.f32.mrb[0].mxu0
    %v2133 = vadd.f32 0.0, %v2132
    %v2134 = vpop.f32.mrb[0].mxu0
    %2135 = vmatprep.mubr.f32.mxu0 0.0
    %2136 = vmatmul.mubr.f32.gmra.mrb[0].mxu0 %v2064
    %v2137 = vpop.f32.mrb[0].mxu0
    %v2138 = vadd.f32 0.0, %v2137
    %v2139 = vpop.f32.mrb[0].mxu0
    %2140 = vdwg.mxu0
    %v2141 = vadd.f32 %v1891, %v2133
    %v2142 = vadd.f32 %v1892, %v2138
    %s2143 = scalar_lea.vmem %s15, 1
    %v2144 = vld [vmem:[%s2143] sm:$0x1]
    %v2146 = vlaneseq
    %v2147 = vshrl.u32 %v2146, 7
    %v2148 = vsub.s32 0, %v2147
    %v2149 = vrot.slane %v2144, %v2148
    %v2151 = vadd.f32 %v2141, %v2149
    %v2152 = vadd.f32 %v2142, %v2149
    %v2153 = vld [vmem:[%s16] sm:$0x1]
    %v2154 = vld [vmem:[%s17] sm:$0x1]
    %v2155 = vsel %vm182, %v2151, 0.0
    %2156 = vadd.xlane.f32.xlu0 %v2155
    %v2157 = vpop.xlane.xlu0 %2156
    %v2158 = vsel %vm186, %v2152, 0.0
    %2159 = vadd.xlane.f32.xlu0 %v2158
    %v2160 = vpop.xlane.xlu0 %2159
    %v2161 = vmul.f32 %v2157, %v190
    %v2162 = vmul.f32 %v2160, %v190
    %v2163 = vsub.f32 %v2151, %v2161
    %v2164 = vsub.f32 %v2152, %v2162
    %v2165 = vmul.f32 %v2163, %v2163
    %v2166 = vmul.f32 %v2164, %v2164
    %v2167 = vsel %vm182, %v2165, 0.0
    %2168 = vadd.xlane.f32.xlu0 %v2167
    %v2169 = vpop.xlane.xlu0 %2168
    %v2170 = vsel %vm186, %v2166, 0.0
    %2171 = vadd.xlane.f32.xlu0 %v2170
    %v2172 = vpop.xlane.xlu0 %2171
    %v2173 = vmul.f32 %v2169, %v190
    %v2174 = vmul.f32 %v2172, %v190
    %v2175 = vadd.f32 %v2173, 1e-12
    %v2176 = vadd.f32 %v2174, 1e-12
    %v2177 = vrsqrt.pop %v2175
    %v2178 = vrsqrt.pop %v2176
    %v2179 = vmul.f32 %v2163, %v2177
    %v2180 = vmul.f32 %v2164, %v2178
    %v2182 = vlaneseq
    %v2183 = vshrl.u32 %v2182, 7
    %v2184 = vsub.s32 0, %v2183
    %v2185 = vrot.slane %v2153, %v2184
    %v2187 = vmul.f32 %v2179, %v2185
    %v2188 = vmul.f32 %v2180, %v2185
    %v2190 = vlaneseq
    %v2191 = vshrl.u32 %v2190, 7
    %v2192 = vsub.s32 0, %v2191
    %v2193 = vrot.slane %v2154, %v2192
    %v2195 = vadd.f32 %v2187, %v2193
    %v2196 = vadd.f32 %v2188, %v2193
    %v2197 = vld [vmem:[%s18] sm:$0xff]
    %v2198 = vld [vmem:[%s18 + $0x8] sm:$0xff]
    %v2199 = vld [vmem:[%s18 + $0x10] sm:$0xff]
    %v2200 = vld [vmem:[%s18 + $0x18] sm:$0xff]
    %v2201 = vld [vmem:[%s19] sm:$0x1]
    %v2203 = vlaneseq
    %v2204 = vshrl.u32 %v2203, 7
    %v2205 = vsub.s32 0, %v2204
    %v2206 = vrot.slane %v2201, %v2205
    %v2209 = vsel %vm182, %v2195, 0
    %v2212 = vsel %vm182, %v2196, 0
    %2214 = vmatprep.subr.mxu0 0.0
    %2215 = vmatpush1.msra.mxu0 %v2197
    %2216 = vmatprep.subr.mxu0 0.0
    %2217 = vmatpush1.msra.mxu0 %v2198
    %2218 = vmatprep.subr.mxu0 0.0
    %2219 = vmatpush1.msra.mxu0 %v2199
    %2220 = vmatprep.subr.mxu0 0.0
    %2221 = vmatpush1.msra.mxu0 %v2200
    %2222 = vmatprep.subr.mxu0 0.0
    %2223 = vmatpush1.msra.mxu0 0.0
    %2224 = vmatprep.subr.mxu0 0.0
    %2225 = vmatpush1.msra.mxu0 0.0
    %2226 = vmatprep.subr.mxu0 0.0
    %2227 = vmatpush1.msra.mxu0 0.0
    %2228 = vmatprep.subr.mxu0 0.0
    %2229 = vmatpush1.msra.mxu0 0.0
    %2230 = vmatprep.subr.mxu0 0.0
    %2231 = vmatpush1.msra.mxu0 0.0
    %2232 = vmatprep.subr.mxu0 0.0
    %2233 = vmatpush1.msra.mxu0 0.0
    %2234 = vmatprep.subr.mxu0 0.0
    %2235 = vmatpush1.msra.mxu0 0.0
    %2236 = vmatprep.subr.mxu0 0.0
    %2237 = vmatpush1.msra.mxu0 0.0
    %2238 = vmatprep.subr.mxu0 0.0
    %2239 = vmatpush1.msra.mxu0 0.0
    %2240 = vmatprep.subr.mxu0 0.0
    %2241 = vmatpush1.msra.mxu0 0.0
    %2242 = vmatprep.subr.mxu0 0.0
    %2243 = vmatpush1.msra.mxu0 0.0
    %2244 = vmatprep.subr.mxu0 0.0
    %2245 = vmatpush1.msra.mxu0 0.0
    %2246 = vmatprep.subr.mxu0 0.0
    %2247 = vmatpush1.msra.mxu0 0.0
    %2248 = vmatprep.subr.mxu0 0.0
    %2249 = vmatpush1.msra.mxu0 0.0
    %2250 = vmatprep.subr.mxu0 0.0
    %2251 = vmatpush1.msra.mxu0 0.0
    %2252 = vmatprep.subr.mxu0 0.0
    %2253 = vmatpush1.msra.mxu0 0.0
    %2254 = vmatprep.subr.mxu0 0.0
    %2255 = vmatpush1.msra.mxu0 0.0
    %2256 = vmatprep.subr.mxu0 0.0
    %2257 = vmatpush1.msra.mxu0 0.0
    %2258 = vmatprep.subr.mxu0 0.0
    %2259 = vmatpush1.msra.mxu0 0.0
    %2260 = vmatprep.subr.mxu0 0.0
    %2261 = vmatpush1.msra.mxu0 0.0
    %2262 = vmatprep.subr.mxu0 0.0
    %2263 = vmatpush1.msra.mxu0 0.0
    %2264 = vmatprep.subr.mxu0 0.0
    %2265 = vmatpush1.msra.mxu0 0.0
    %2266 = vmatprep.subr.mxu0 0.0
    %2267 = vmatpush1.msra.mxu0 0.0
    %2268 = vmatprep.subr.mxu0 0.0
    %2269 = vmatpush1.msra.mxu0 0.0
    %2270 = vmatprep.subr.mxu0 0.0
    %2271 = vmatpush1.msra.mxu0 0.0
    %2272 = vmatprep.subr.mxu0 0.0
    %2273 = vmatpush1.msra.mxu0 0.0
    %2274 = vmatprep.subr.mxu0 0.0
    %2275 = vmatpush1.msra.mxu0 0.0
    %2276 = vmatprep.subr.mxu0 0.0
    %2277 = vmatpush1.msra.mxu0 0.0
    %2278 = vmatprep.mubr.f32.mxu0 0.0
    %2279 = vmatmul.mubr.f32.gmra.mrb[0].mxu0 %v2209
    %v2280 = vpop.f32.mrb[0].mxu0
    %v2281 = vadd.f32 %v2206, %v2280
    %v2282 = vpop.f32.mrb[0].mxu0
    %2283 = vmatprep.mubr.f32.mxu0 0.0
    %2284 = vmatmul.mubr.f32.gmra.mrb[0].mxu0 %v2212
    %v2285 = vpop.f32.mrb[0].mxu0
    %v2286 = vpop.f32.mrb[0].mxu0
    %2287 = vdwg.mxu0
    %2288 = vst [vmem:[#allocation2] sm:$0x1] %v2281
    %2289 = vst [vmem:[#allocation2 - $0x4] sm:$0x20] %v2281
    // Predicated region
    $region82: #{fwd.1} parent=1 // pred_check
      _
    $region83: #{fwd.1} parent=1 // pred_check_branch
      %2291 = sbr.rel (0) target = $region85
    $region84: #{fwd.1} parent=1 // pred_region
      %s2293 = ssub.s32 32, 32
      %2294 = vsyncadd [#allocation3], %s2293
      %s2296 = sshll.u32 [#allocation2], 4
      %s2297 = int_to_ptr.vmem [resolvable:$true] %s2296
      %2299 = dma.vmem_to_hbm [thread:$0]  %s2297, 32, %s20, [#allocation3]
    $region85: #{fwd.1} parent=1 // pred_fallthru
      _
    // Predicated region
    $region86: #{fwd.1} parent=1 // pred_check
      _
    $region87: #{fwd.1} parent=1 // pred_check_branch
      %2301 = sbr.rel (0) target = $region89
    $region88: #{fwd.1} parent=1 // pred_region
      %2302 = dma.done [#allocation3], 32
    $region89: #{fwd.1} parent=1 // pred_fallthru
      _
    %2303 = vsyncpa [#allocation3], 1

</llo_original>
